<compile_context>
chip_gen: v7x
topology: tpu7x:2x2x1
jax: 0.10.0
libtpu: 0.0.40
codegen_flags: <defaults>
</compile_context>

<pallas_src>
import numpy as np
import jax
import jax.numpy as jnp
from jax.experimental import pallas as pl
from jax.experimental.pallas import tpu as pltpu  # noqa: F401  (TPU backend assumed)

EPS = 1e-5


def _round_up(x, m):
    return (x + m - 1) // m * m


# ----------------------------------------------------------------------------
# One-time host-side parameter packing: many small matrices -> one 2-D blob +
# static (offset, rows, cols) metadata for zero-cost static ref slicing.
# Row offsets stay 16-aligned (bf16 blob) / 8-aligned (f32 blob), column start
# 0, lanes padded to 128, so every fetched slab starts on a tile boundary.
# ----------------------------------------------------------------------------
def _pack(arrays, dtype, row_align):
    lanes = _round_up(max(int(a.shape[1]) for a in arrays), 128)
    meta, chunks, off = [], [], 0
    for a in arrays:
        a = np.asarray(a, np.float32)
        r, c = a.shape
        rp = _round_up(r, row_align)
        buf = np.zeros((rp, lanes), np.float32)
        buf[:r, :c] = a
        chunks.append(buf)
        meta.append((off, r, c))
        off += rp
    return jnp.asarray(np.concatenate(chunks, axis=0), dtype), tuple(meta)


# ----------------------------------------------------------------------------
# Per-layer matrix construction (host-side numpy, runs once)
# ----------------------------------------------------------------------------
def _conv_layer_matrices(weight, bias, gamma, beta, N, H, W, stride, pad):
    """Conv2d(+bias) -> ReLU -> BatchNorm2d as matmul operands.

    Activation layout is 2-D: rows = (n, h), cols = (w, c).
    All KH row-tap selection matrices are stacked vertically; each tap block is
    padded to 8 rows so the kernel's static slices of the selection result are
    sublane-aligned.
    """
    weight = np.asarray(weight, np.float32)            # (KH, KW, Cin, Cout)
    KH, KW, Cin, Cout = weight.shape
    OH = (H + 2 * pad - KH) // stride + 1
    OW = (W + 2 * pad - KW) // stride + 1
    NOH = N * OH
    B8 = _round_up(NOH, 8)

    # Stacked row-tap selection: block kh occupies rows [kh*B8, kh*B8 + NOH).
    # Out-of-range rows (spatial zero padding) stay all-zero.
    Rstack = np.zeros((KH * B8, N * H), np.float32)
    for kh in range(KH):
        for n in range(N):
            for oh in range(OH):
                h = stride * oh + kh - pad
                if 0 <= h < H:
                    Rstack[kh * B8 + n * OH + oh, n * H + h] = 1.0
    mm = [Rstack]

    # Column taps + channel mixing folded into one matrix per kh:
    #   Wb_kh[(w,ci),(ow,co)] = sum_kw [w == stride*ow + kw - pad] * K[kh,kw,ci,co]
    for kh in range(KH):
        Wb = np.zeros((W * Cin, OW * Cout), np.float32)
        for kw in range(KW):
            S = np.zeros((W, OW), np.float32)
            for ow in range(OW):
                w = stride * ow + kw - pad
                if 0 <= w < W:
                    S[w, ow] = 1.0
            Wb += np.kron(S, weight[kh, kw])
        mm.append(Wb)

    bias = np.asarray(bias, np.float32)
    gamma = np.asarray(gamma, np.float32)
    beta = np.asarray(beta, np.float32)
    # Per-channel params tiled over the (ow, c) lane layout; G averages each
    # channel over (n, oh, ow) and broadcasts it back per lane.
    pp = [np.tile(bias, OW).reshape(1, OW * Cout),
          np.tile(gamma, OW).reshape(1, OW * Cout),
          np.tile(beta, OW).reshape(1, OW * Cout),
          np.kron(np.ones((OW, OW), np.float32),
                  np.eye(Cout, dtype=np.float32)) / float(NOH * OW)]
    return mm, pp, (KH, NOH, B8, OW), (OH, OW, Cout)


def _mlp_matrices_flat(mlp_weights, OH, OW, C, q_dim):
    """OH == 1: conv output rows are already per-sample; fold the torch flatten
    row order + the q concatenation into a single full-W1 matmul operand."""
    W1 = np.asarray(mlp_weights[0][0], np.float32)
    b1 = np.asarray(mlp_weights[0][1], np.float32)
    flat = C * OH * OW
    assert W1.shape[0] == flat + q_dim, (W1.shape, flat, q_dim)
    # reorder conv-feature rows from torch flat order (c, oh=0, ow) to lane
    # order (ow, c)
    idx = np.asarray([c * OH * OW + ow for ow in range(OW) for c in range(C)],
                     np.int64)
    W1r = np.concatenate([W1[:flat][idx], W1[flat:]], axis=0)
    mm = [W1r]
    pp = [b1.reshape(1, -1)]
    for Wl, bl in mlp_weights[1:]:
        mm.append(np.asarray(Wl, np.float32))
        pp.append(np.asarray(bl, np.float32).reshape(1, -1))
    return mm, pp


def _mlp_matrices_general(mlp_weights, N, OH, OW, C, q_dim):
    """General OH > 1 fallback (selection-matmul flatten), as in prior version."""
    W1 = np.asarray(mlp_weights[0][0], np.float32)
    b1 = np.asarray(mlp_weights[0][1], np.float32)
    flat = C * OH * OW
    assert W1.shape[0] == flat + q_dim, (W1.shape, flat, q_dim)
    mm, pp = [], []
    for oh in range(OH):
        Sel = np.zeros((N, N * OH), np.float32)
        for n in range(N):
            Sel[n, n * OH + oh] = 1.0
        mm.append(Sel)
        idx = np.asarray([c * OH * OW + oh * OW + ow
                          for ow in range(OW) for c in range(C)], np.int64)
        mm.append(W1[:flat][idx])
    mm.append(W1[flat:])                     # q part of layer-1 weight
    pp.append(b1.reshape(1, -1))
    for Wl, bl in mlp_weights[1:]:
        mm.append(np.asarray(Wl, np.float32))
        pp.append(np.asarray(bl, np.float32).reshape(1, -1))
    return mm, pp, OH


# ----------------------------------------------------------------------------
# The single fused Pallas kernel
# ----------------------------------------------------------------------------
def _build_kernel(conv_cfgs, head_mode, n_sel, n_mlp, mm_meta, pp_meta):
    def fetch(ref, meta, i):
        off, r, c = meta[i]
        return ref[off:off + r, 0:c]          # aligned static ref slice

    def kernel(x_ref, q_ref, mm_ref, pp_ref, o_ref):
        mi = 0
        pi = 0
        x = x_ref[...]                         # f32, rows=(n,h), cols=(w,c)

        # ---- conv stack: Conv2d -> ReLU -> BatchNorm2d, all VMEM resident ----
        for (KH, NOH, B8, OW) in conv_cfgs:
            Rstack = fetch(mm_ref, mm_meta, mi)
            mi += 1
            # ONE stacked row-tap selection matmul (was KH tiny dots)
            rows_all = jnp.dot(Rstack, x.astype(jnp.bfloat16),
                               preferred_element_type=jnp.float32)
            acc = None
            for kh in range(KH):
                Wb = fetch(mm_ref, mm_meta, mi)
                mi += 1
                blk = rows_all[kh * B8:kh * B8 + NOH, :]   # aligned static slice
                part = jnp.dot(blk.astype(jnp.bfloat16), Wb,
                               preferred_element_type=jnp.float32)
                acc = part if acc is None else acc + part  # adjacent dots, same acc

            bias = fetch(pp_ref, pp_meta, pi)
            gamma = fetch(pp_ref, pp_meta, pi + 1)
            beta = fetch(pp_ref, pp_meta, pi + 2)

            y = jnp.maximum(acc + bias, 0.0)               # conv bias + ReLU (f32)
            # single-pass BN batch statistics (biased variance), f32 throughout
            rs = jnp.sum(y, axis=0, keepdims=True)
            rss = jnp.sum(y * y, axis=0, keepdims=True)
            if OW == 1:
                inv = 1.0 / float(NOH)                     # channel mean is a scale
                mean = rs * inv
                meansq = rss * inv
            else:
                # fused stats: one (2, OW*C) x (OW*C, OW*C) dot instead of two
                G = fetch(pp_ref, pp_meta, pi + 3)
                stats = jnp.dot(jnp.concatenate([rs, rss], axis=0), G,
                                preferred_element_type=jnp.float32)
                mean = stats[0:1, :]
                meansq = stats[1:2, :]
            pi += 4
            var = jnp.maximum(meansq - mean * mean, 0.0)
            scale = gamma * jax.lax.rsqrt(var + EPS)       # rsqrt -> EUP (free slot)
            shift = beta - mean * scale
            x = y * scale + shift                          # folded BN affine

        # ---- flatten (torch .view order baked into W1) + cat(q) + 7-layer MLP ----
        if head_mode == "flat":
            # OH == 1: x is already x_flat in lane order; fold q via lane-concat
            xq = jnp.concatenate([x, q_ref[...]], axis=1).astype(jnp.bfloat16)
            W1 = fetch(mm_ref, mm_meta, mi)
            b1 = fetch(pp_ref, pp_meta, pi)
            mi += 1
            pi += 1
            h = jnp.maximum(
                jnp.dot(xq, W1, preferred_element_type=jnp.float32) + b1, 0.0)
        else:
            xb = x.astype(jnp.bfloat16)
            h = None
            for _ in range(n_sel):
                Sel = fetch(mm_ref, mm_meta, mi)
                W1a = fetch(mm_ref, mm_meta, mi + 1)
                mi += 2
                rows = jnp.dot(Sel, xb, preferred_element_type=jnp.float32)
                part = jnp.dot(rows.astype(jnp.bfloat16), W1a,
                               preferred_element_type=jnp.float32)
                h = part if h is None else h + part
            W1b = fetch(mm_ref, mm_meta, mi)
            mi += 1
            h = h + jnp.dot(q_ref[...].astype(jnp.bfloat16), W1b,
                            preferred_element_type=jnp.float32)
            h = jnp.maximum(h + fetch(pp_ref, pp_meta, pi), 0.0)
            pi += 1

        for li in range(1, n_mlp):
            W = fetch(mm_ref, mm_meta, mi)
            b = fetch(pp_ref, pp_meta, pi)
            mi += 1
            pi += 1
            h = jnp.dot(h.astype(jnp.bfloat16), W,
                        preferred_element_type=jnp.float32) + b
            if li < n_mlp - 1:
                h = jnp.maximum(h, 0.0)
        o_ref[...] = h                                     # only HBM store

    return kernel


# ----------------------------------------------------------------------------
# Forward builder: ONE-TIME preprocessing (host), returns jitted forward(im, q)
# ----------------------------------------------------------------------------
def make_forward(conv_params, mlp_params, params, input_shape, q_dim):
    conv_params = tuple(tuple(int(v) for v in c) for c in conv_params)
    mlp_params = tuple(tuple(int(v) for v in m) for m in mlp_params)
    N, C0, H0, W0 = (int(v) for v in input_shape)
    Dq = int(q_dim)
    out_dim = mlp_params[-1][1]

    mm_list, pp_list, conv_cfgs = [], [], []
    flops, trans = 0, 0
    H, W, C = H0, W0, C0
    for (wt, b, gamma, beta), (cin, cout, k, stride, pad) in zip(
            params["conv"], conv_params):
        assert wt.shape == (k, k, cin, cout) and cin == C
        mm, pp, cfg, (OH, OW, C) = _conv_layer_matrices(
            wt, b, gamma, beta, N, H, W, stride, pad)
        KH, NOH, B8, _ = cfg
        flops += 2 * (KH * B8) * (N * H) * (W * cin)        # stacked selection dot
        flops += KH * 2 * NOH * (W * cin) * (OW * cout)     # tap matmuls
        if OW > 1:
            flops += 2 * 2 * (OW * cout) * (OW * cout)      # fused BN-stat dot
        trans += OW * cout                                  # rsqrt lanes
        mm_list += mm
        pp_list += pp
        conv_cfgs.append(cfg)
        H, W = OH, OW

    flat = C * H * W
    if H == 1:
        head_mode, n_sel = "flat", 0
        mm, pp = _mlp_matrices_flat(params["mlp"], H, W, C, Dq)
    else:
        head_mode = "general"
        mm, pp, n_sel = _mlp_matrices_general(params["mlp"], N, H, W, C, Dq)
    mm_list += mm
    pp_list += pp
    n_mlp = len(params["mlp"])
    for (d_in, d_out) in mlp_params:
        flops += 2 * N * d_in * d_out

    mm_blob, mm_meta = _pack(mm_list, jnp.bfloat16, row_align=16)
    pp_blob, pp_meta = _pack(pp_list, jnp.float32, row_align=8)

    kernel = _build_kernel(tuple(conv_cfgs), head_mode, n_sel, n_mlp,
                           mm_meta, pp_meta)
    bytes_accessed = (int(mm_blob.size) * 2 + int(pp_blob.size) * 4
                      + N * H0 * W0 * C0 * 4 + N * Dq * 4 + N * out_dim * 4)
    fused = pl.pallas_call(
        kernel,
        out_shape=jax.ShapeDtypeStruct((N, out_dim), jnp.float32),
        cost_estimate=pl.CostEstimate(flops=int(flops),
                                      transcendentals=int(trans),
                                      bytes_accessed=int(bytes_accessed)),
    )

    @jax.jit
    def _forward(im_nchw, q, mm, pp):
        # NCHW -> kernel's 2-D layout: rows = (n, h), cols = (w, c)
        x2d = jnp.transpose(im_nchw, (0, 2, 3, 1)).reshape(N * H0, W0 * C0)
        return fused(x2d, q, mm, pp)

    def forward(im_nchw, q):
        return _forward(im_nchw, q, mm_blob, pp_blob)

    return forward


# ----------------------------------------------------------------------------
# Deterministic in-script parameter construction
# ----------------------------------------------------------------------------
def init_params(key, conv_params, mlp_params):
    params = {"conv": [], "mlp": []}
    for (cin, cout, k, stride, pad) in conv_params:
        key, kw_, kb_ = jax.random.split(key, 3)
        w = 0.1 * jax.random.normal(kw_, (k, k, cin, cout), jnp.float32)
        b = 0.1 * jax.random.normal(kb_, (cout,), jnp.float32)
        gamma = jnp.ones((cout,), jnp.float32)
        beta = jnp.zeros((cout,), jnp.float32)
        params["conv"].append((w, b, gamma, beta))
    for (din, dout) in mlp_params:
        key, kw_, kb_ = jax.random.split(key, 3)
        w = 0.1 * jax.random.normal(kw_, (din, dout), jnp.float32)
        b = 0.1 * jax.random.normal(kb_, (dout,), jnp.float32)
        params["mlp"].append((w, b))
    return params


if __name__ == "__main__":
    # image [N=2, C=3, 16, 16]; four stride-2 3x3 convs: 16 -> 8 -> 4 -> 2 -> 1
    # flattened conv features 8*1*1 = 8; q [2, 24]; MLP input 8 + 24 = 32
    conv_params = ((3, 8, 3, 2, 1), (8, 8, 3, 2, 1), (8, 8, 3, 2, 1), (8, 8, 3, 2, 1))
    mlp_params = ((32, 32), (32, 32), (32, 32), (32, 32), (32, 32), (32, 32), (32, 10))

    key = jax.random.PRNGKey(0)
    k_param, k_im, k_q = jax.random.split(key, 3)
    params = init_params(k_param, conv_params, mlp_params)

    im = jax.random.normal(k_im, (2, 3, 16, 16), jnp.float32)   # NCHW, like PyTorch
    q = jax.random.normal(k_q, (2, 24), jnp.float32)

    forward = make_forward(conv_params, mlp_params, params,
                           input_shape=im.shape, q_dim=q.shape[1])
    out = jax.block_until_ready(forward(im, q))
    assert out.shape == (2, 10), out.shape
    assert bool(jnp.all(jnp.isfinite(out)))
    print("KERNEL_OK")
</pallas_src>

<mosaic_0001>
module attributes {stable_mosaic.version = 11 : i64} {
  func.func @kernel(%arg0: memref<32x48xf32, #tpu.memory_space<vmem>>, %arg1: memref<2x24xf32, #tpu.memory_space<vmem>>, %arg2: memref<848x128xbf16, #tpu.memory_space<vmem>>, %arg3: memref<272x128xf32, #tpu.memory_space<vmem>>, %arg4: memref<2x10xf32, #tpu.memory_space<vmem>>) attributes {dimension_semantics = [], scalar_prefetch = 0 : i64, scratch_operands = 0 : i64, tpu.core_type = #tpu.core_type<tc>} {
    %c0 = arith.constant 0 : index
    %c0_0 = arith.constant 0 : index
    %0 = vector.load %arg0[%c0, %c0_0] : memref<32x48xf32, #tpu.memory_space<vmem>>, vector<32x48xf32>
    %c0_1 = arith.constant 0 : index
    %c0_2 = arith.constant 0 : index
    %1 = vector.load %arg2[%c0_1, %c0_2] : memref<848x128xbf16, #tpu.memory_space<vmem>>, vector<48x32xbf16>
    %2 = arith.truncf %0 : vector<32x48xf32> to vector<32x48xbf16>
    %cst = arith.constant dense<0.000000e+00> : vector<48x48xf32>
    %3 = tpu.matmul %1, %2, %cst {dimension_numbers = #tpu.dot_dimension_numbers<[1], [0], [0], [1], [0, 0, 1, 1], [], []>} : vector<48x32xbf16>, vector<32x48xbf16>, vector<48x48xf32> -> vector<48x48xf32>
    %c48 = arith.constant 48 : index
    %c0_3 = arith.constant 0 : index
    %4 = vector.load %arg2[%c48, %c0_3] : memref<848x128xbf16, #tpu.memory_space<vmem>>, vector<48x64xbf16>
    %5 = vector.extract_strided_slice %3 {offsets = [0, 0], sizes = [16, 48], strides = [1, 1]} : vector<48x48xf32> to vector<16x48xf32>
    %6 = arith.truncf %5 : vector<16x48xf32> to vector<16x48xbf16>
    %cst_4 = arith.constant dense<0.000000e+00> : vector<16x64xf32>
    %7 = tpu.matmul %6, %4, %cst_4 {dimension_numbers = #tpu.dot_dimension_numbers<[1], [0], [0], [1], [0, 0, 1, 1], [], []>} : vector<16x48xbf16>, vector<48x64xbf16>, vector<16x64xf32> -> vector<16x64xf32>
    %c96 = arith.constant 96 : index
    %c0_5 = arith.constant 0 : index
    %8 = vector.load %arg2[%c96, %c0_5] : memref<848x128xbf16, #tpu.memory_space<vmem>>, vector<48x64xbf16>
    %9 = vector.extract_strided_slice %3 {offsets = [16, 0], sizes = [16, 48], strides = [1, 1]} : vector<48x48xf32> to vector<16x48xf32>
    %10 = arith.truncf %9 : vector<16x48xf32> to vector<16x48xbf16>
    %cst_6 = arith.constant dense<0.000000e+00> : vector<16x64xf32>
    %11 = tpu.matmul %10, %8, %cst_6 {dimension_numbers = #tpu.dot_dimension_numbers<[1], [0], [0], [1], [0, 0, 1, 1], [], []>} : vector<16x48xbf16>, vector<48x64xbf16>, vector<16x64xf32> -> vector<16x64xf32>
    %12 = arith.addf %7, %11 : vector<16x64xf32>
    %c144 = arith.constant 144 : index
    %c0_7 = arith.constant 0 : index
    %13 = vector.load %arg2[%c144, %c0_7] : memref<848x128xbf16, #tpu.memory_space<vmem>>, vector<48x64xbf16>
    %14 = vector.extract_strided_slice %3 {offsets = [32, 0], sizes = [16, 48], strides = [1, 1]} : vector<48x48xf32> to vector<16x48xf32>
    %15 = arith.truncf %14 : vector<16x48xf32> to vector<16x48xbf16>
    %cst_8 = arith.constant dense<0.000000e+00> : vector<16x64xf32>
    %16 = tpu.matmul %15, %13, %cst_8 {dimension_numbers = #tpu.dot_dimension_numbers<[1], [0], [0], [1], [0, 0, 1, 1], [], []>} : vector<16x48xbf16>, vector<48x64xbf16>, vector<16x64xf32> -> vector<16x64xf32>
    %17 = arith.addf %12, %16 : vector<16x64xf32>
    %c0_9 = arith.constant 0 : index
    %c0_10 = arith.constant 0 : index
    %18 = vector.load %arg3[%c0_9, %c0_10] : memref<272x128xf32, #tpu.memory_space<vmem>>, vector<1x64xf32>
    %c8 = arith.constant 8 : index
    %c0_11 = arith.constant 0 : index
    %19 = vector.load %arg3[%c8, %c0_11] : memref<272x128xf32, #tpu.memory_space<vmem>>, vector<1x64xf32>
    %c16 = arith.constant 16 : index
    %c0_12 = arith.constant 0 : index
    %20 = vector.load %arg3[%c16, %c0_12] : memref<272x128xf32, #tpu.memory_space<vmem>>, vector<1x64xf32>
    %21 = vector.broadcast %18 : vector<1x64xf32> to vector<16x64xf32>
    %22 = arith.addf %17, %21 : vector<16x64xf32>
    %cst_13 = arith.constant 0.000000e+00 : f32
    %23 = vector.broadcast %cst_13 : f32 to vector<16x64xf32>
    %24 = arith.maximumf %22, %23 : vector<16x64xf32>
    %cst_14 = arith.constant dense<0.000000e+00> : vector<64xf32>
    %25 = vector.multi_reduction <add>, %24, %cst_14 [0] : vector<16x64xf32> to vector<64xf32>
    %26 = vector.shape_cast %25 : vector<64xf32> to vector<1x64xf32>
    %27 = arith.mulf %24, %24 : vector<16x64xf32>
    %cst_15 = arith.constant dense<0.000000e+00> : vector<64xf32>
    %28 = vector.multi_reduction <add>, %27, %cst_15 [0] : vector<16x64xf32> to vector<64xf32>
    %29 = vector.shape_cast %28 : vector<64xf32> to vector<1x64xf32>
    %c24 = arith.constant 24 : index
    %c0_16 = arith.constant 0 : index
    %30 = vector.load %arg3[%c24, %c0_16] : memref<272x128xf32, #tpu.memory_space<vmem>>, vector<64x64xf32>
    %31 = tpu.concatenate %26, %29 in 0 : vector<1x64xf32>, vector<1x64xf32> -> vector<2x64xf32>
    %cst_17 = arith.constant dense<0.000000e+00> : vector<2x64xf32>
    %32 = tpu.matmul %31, %30, %cst_17 {dimension_numbers = #tpu.dot_dimension_numbers<[1], [0], [0], [1], [0, 0, 1, 1], [], []>} : vector<2x64xf32>, vector<64x64xf32>, vector<2x64xf32> -> vector<2x64xf32>
    %33 = vector.extract_strided_slice %32 {offsets = [0, 0], sizes = [1, 64], strides = [1, 1]} : vector<2x64xf32> to vector<1x64xf32>
    %34 = vector.extract_strided_slice %32 {offsets = [1, 0], sizes = [1, 64], strides = [1, 1]} : vector<2x64xf32> to vector<1x64xf32>
    %35 = arith.mulf %33, %33 : vector<1x64xf32>
    %36 = arith.subf %34, %35 : vector<1x64xf32>
    %cst_18 = arith.constant 0.000000e+00 : f32
    %37 = vector.broadcast %cst_18 : f32 to vector<1x64xf32>
    %38 = arith.maximumf %36, %37 : vector<1x64xf32>
    %cst_19 = arith.constant 9.99999974E-6 : f32
    %39 = vector.broadcast %cst_19 : f32 to vector<1x64xf32>
    %40 = arith.addf %38, %39 : vector<1x64xf32>
    %41 = math.rsqrt %40 : vector<1x64xf32>
    %42 = arith.mulf %19, %41 : vector<1x64xf32>
    %43 = arith.mulf %33, %42 : vector<1x64xf32>
    %44 = arith.subf %20, %43 : vector<1x64xf32>
    %45 = vector.broadcast %42 : vector<1x64xf32> to vector<16x64xf32>
    %46 = arith.mulf %24, %45 : vector<16x64xf32>
    %47 = vector.broadcast %44 : vector<1x64xf32> to vector<16x64xf32>
    %48 = arith.addf %46, %47 : vector<16x64xf32>
    %c192 = arith.constant 192 : index
    %c0_20 = arith.constant 0 : index
    %49 = vector.load %arg2[%c192, %c0_20] : memref<848x128xbf16, #tpu.memory_space<vmem>>, vector<24x16xbf16>
    %50 = arith.truncf %48 : vector<16x64xf32> to vector<16x64xbf16>
    %cst_21 = arith.constant dense<0.000000e+00> : vector<24x64xf32>
    %51 = tpu.matmul %49, %50, %cst_21 {dimension_numbers = #tpu.dot_dimension_numbers<[1], [0], [0], [1], [0, 0, 1, 1], [], []>} : vector<24x16xbf16>, vector<16x64xbf16>, vector<24x64xf32> -> vector<24x64xf32>
    %c224 = arith.constant 224 : index
    %c0_22 = arith.constant 0 : index
    %52 = vector.load %arg2[%c224, %c0_22] : memref<848x128xbf16, #tpu.memory_space<vmem>>, vector<64x32xbf16>
    %53 = vector.extract_strided_slice %51 {offsets = [0, 0], sizes = [8, 64], strides = [1, 1]} : vector<24x64xf32> to vector<8x64xf32>
    %54 = arith.truncf %53 : vector<8x64xf32> to vector<8x64xbf16>
    %cst_23 = arith.constant dense<0.000000e+00> : vector<8x32xf32>
    %55 = tpu.matmul %54, %52, %cst_23 {dimension_numbers = #tpu.dot_dimension_numbers<[1], [0], [0], [1], [0, 0, 1, 1], [], []>} : vector<8x64xbf16>, vector<64x32xbf16>, vector<8x32xf32> -> vector<8x32xf32>
    %c288 = arith.constant 288 : index
    %c0_24 = arith.constant 0 : index
    %56 = vector.load %arg2[%c288, %c0_24] : memref<848x128xbf16, #tpu.memory_space<vmem>>, vector<64x32xbf16>
    %57 = vector.extract_strided_slice %51 {offsets = [8, 0], sizes = [8, 64], strides = [1, 1]} : vector<24x64xf32> to vector<8x64xf32>
    %58 = arith.truncf %57 : vector<8x64xf32> to vector<8x64xbf16>
    %cst_25 = arith.constant dense<0.000000e+00> : vector<8x32xf32>
    %59 = tpu.matmul %58, %56, %cst_25 {dimension_numbers = #tpu.dot_dimension_numbers<[1], [0], [0], [1], [0, 0, 1, 1], [], []>} : vector<8x64xbf16>, vector<64x32xbf16>, vector<8x32xf32> -> vector<8x32xf32>
    %60 = arith.addf %55, %59 : vector<8x32xf32>
    %c352 = arith.constant 352 : index
    %c0_26 = arith.constant 0 : index
    %61 = vector.load %arg2[%c352, %c0_26] : memref<848x128xbf16, #tpu.memory_space<vmem>>, vector<64x32xbf16>
    %62 = vector.extract_strided_slice %51 {offsets = [16, 0], sizes = [8, 64], strides = [1, 1]} : vector<24x64xf32> to vector<8x64xf32>
    %63 = arith.truncf %62 : vector<8x64xf32> to vector<8x64xbf16>
    %cst_27 = arith.constant dense<0.000000e+00> : vector<8x32xf32>
    %64 = tpu.matmul %63, %61, %cst_27 {dimension_numbers = #tpu.dot_dimension_numbers<[1], [0], [0], [1], [0, 0, 1, 1], [], []>} : vector<8x64xbf16>, vector<64x32xbf16>, vector<8x32xf32> -> vector<8x32xf32>
    %65 = arith.addf %60, %64 : vector<8x32xf32>
    %c88 = arith.constant 88 : index
    %c0_28 = arith.constant 0 : index
    %66 = vector.load %arg3[%c88, %c0_28] : memref<272x128xf32, #tpu.memory_space<vmem>>, vector<1x32xf32>
    %c96_29 = arith.constant 96 : index
    %c0_30 = arith.constant 0 : index
    %67 = vector.load %arg3[%c96_29, %c0_30] : memref<272x128xf32, #tpu.memory_space<vmem>>, vector<1x32xf32>
    %c104 = arith.constant 104 : index
    %c0_31 = arith.constant 0 : index
    %68 = vector.load %arg3[%c104, %c0_31] : memref<272x128xf32, #tpu.memory_space<vmem>>, vector<1x32xf32>
    %69 = vector.broadcast %66 : vector<1x32xf32> to vector<8x32xf32>
    %70 = arith.addf %65, %69 : vector<8x32xf32>
    %cst_32 = arith.constant 0.000000e+00 : f32
    %71 = vector.broadcast %cst_32 : f32 to vector<8x32xf32>
    %72 = arith.maximumf %70, %71 : vector<8x32xf32>
    %cst_33 = arith.constant dense<0.000000e+00> : vector<32xf32>
    %73 = vector.multi_reduction <add>, %72, %cst_33 [0] : vector<8x32xf32> to vector<32xf32>
    %74 = vector.shape_cast %73 : vector<32xf32> to vector<1x32xf32>
    %75 = arith.mulf %72, %72 : vector<8x32xf32>
    %cst_34 = arith.constant dense<0.000000e+00> : vector<32xf32>
    %76 = vector.multi_reduction <add>, %75, %cst_34 [0] : vector<8x32xf32> to vector<32xf32>
    %77 = vector.shape_cast %76 : vector<32xf32> to vector<1x32xf32>
    %c112 = arith.constant 112 : index
    %c0_35 = arith.constant 0 : index
    %78 = vector.load %arg3[%c112, %c0_35] : memref<272x128xf32, #tpu.memory_space<vmem>>, vector<32x32xf32>
    %79 = tpu.concatenate %74, %77 in 0 : vector<1x32xf32>, vector<1x32xf32> -> vector<2x32xf32>
    %cst_36 = arith.constant dense<0.000000e+00> : vector<2x32xf32>
    %80 = tpu.matmul %79, %78, %cst_36 {dimension_numbers = #tpu.dot_dimension_numbers<[1], [0], [0], [1], [0, 0, 1, 1], [], []>} : vector<2x32xf32>, vector<32x32xf32>, vector<2x32xf32> -> vector<2x32xf32>
    %81 = vector.extract_strided_slice %80 {offsets = [0, 0], sizes = [1, 32], strides = [1, 1]} : vector<2x32xf32> to vector<1x32xf32>
    %82 = vector.extract_strided_slice %80 {offsets = [1, 0], sizes = [1, 32], strides = [1, 1]} : vector<2x32xf32> to vector<1x32xf32>
    %83 = arith.mulf %81, %81 : vector<1x32xf32>
    %84 = arith.subf %82, %83 : vector<1x32xf32>
    %cst_37 = arith.constant 0.000000e+00 : f32
    %85 = vector.broadcast %cst_37 : f32 to vector<1x32xf32>
    %86 = arith.maximumf %84, %85 : vector<1x32xf32>
    %cst_38 = arith.constant 9.99999974E-6 : f32
    %87 = vector.broadcast %cst_38 : f32 to vector<1x32xf32>
    %88 = arith.addf %86, %87 : vector<1x32xf32>
    %89 = math.rsqrt %88 : vector<1x32xf32>
    %90 = arith.mulf %67, %89 : vector<1x32xf32>
    %91 = arith.mulf %81, %90 : vector<1x32xf32>
    %92 = arith.subf %68, %91 : vector<1x32xf32>
    %93 = vector.broadcast %90 : vector<1x32xf32> to vector<8x32xf32>
    %94 = arith.mulf %72, %93 : vector<8x32xf32>
    %95 = vector.broadcast %92 : vector<1x32xf32> to vector<8x32xf32>
    %96 = arith.addf %94, %95 : vector<8x32xf32>
    %c416 = arith.constant 416 : index
    %c0_39 = arith.constant 0 : index
    %97 = vector.load %arg2[%c416, %c0_39] : memref<848x128xbf16, #tpu.memory_space<vmem>>, vector<24x8xbf16>
    %98 = arith.truncf %96 : vector<8x32xf32> to vector<8x32xbf16>
    %cst_40 = arith.constant dense<0.000000e+00> : vector<24x32xf32>
    %99 = tpu.matmul %97, %98, %cst_40 {dimension_numbers = #tpu.dot_dimension_numbers<[1], [0], [0], [1], [0, 0, 1, 1], [], []>} : vector<24x8xbf16>, vector<8x32xbf16>, vector<24x32xf32> -> vector<24x32xf32>
    %c448 = arith.constant 448 : index
    %c0_41 = arith.constant 0 : index
    %100 = vector.load %arg2[%c448, %c0_41] : memref<848x128xbf16, #tpu.memory_space<vmem>>, vector<32x16xbf16>
    %101 = vector.extract_strided_slice %99 {offsets = [0, 0], sizes = [4, 32], strides = [1, 1]} : vector<24x32xf32> to vector<4x32xf32>
    %102 = arith.truncf %101 : vector<4x32xf32> to vector<4x32xbf16>
    %cst_42 = arith.constant dense<0.000000e+00> : vector<4x16xf32>
    %103 = tpu.matmul %102, %100, %cst_42 {dimension_numbers = #tpu.dot_dimension_numbers<[1], [0], [0], [1], [0, 0, 1, 1], [], []>} : vector<4x32xbf16>, vector<32x16xbf16>, vector<4x16xf32> -> vector<4x16xf32>
    %c480 = arith.constant 480 : index
    %c0_43 = arith.constant 0 : index
    %104 = vector.load %arg2[%c480, %c0_43] : memref<848x128xbf16, #tpu.memory_space<vmem>>, vector<32x16xbf16>
    %105 = vector.extract_strided_slice %99 {offsets = [8, 0], sizes = [4, 32], strides = [1, 1]} : vector<24x32xf32> to vector<4x32xf32>
    %106 = arith.truncf %105 : vector<4x32xf32> to vector<4x32xbf16>
    %cst_44 = arith.constant dense<0.000000e+00> : vector<4x16xf32>
    %107 = tpu.matmul %106, %104, %cst_44 {dimension_numbers = #tpu.dot_dimension_numbers<[1], [0], [0], [1], [0, 0, 1, 1], [], []>} : vector<4x32xbf16>, vector<32x16xbf16>, vector<4x16xf32> -> vector<4x16xf32>
    %108 = arith.addf %103, %107 : vector<4x16xf32>
    %c512 = arith.constant 512 : index
    %c0_45 = arith.constant 0 : index
    %109 = vector.load %arg2[%c512, %c0_45] : memref<848x128xbf16, #tpu.memory_space<vmem>>, vector<32x16xbf16>
    %110 = vector.extract_strided_slice %99 {offsets = [16, 0], sizes = [4, 32], strides = [1, 1]} : vector<24x32xf32> to vector<4x32xf32>
    %111 = arith.truncf %110 : vector<4x32xf32> to vector<4x32xbf16>
    %cst_46 = arith.constant dense<0.000000e+00> : vector<4x16xf32>
    %112 = tpu.matmul %111, %109, %cst_46 {dimension_numbers = #tpu.dot_dimension_numbers<[1], [0], [0], [1], [0, 0, 1, 1], [], []>} : vector<4x32xbf16>, vector<32x16xbf16>, vector<4x16xf32> -> vector<4x16xf32>
    %113 = arith.addf %108, %112 : vector<4x16xf32>
    %c144_47 = arith.constant 144 : index
    %c0_48 = arith.constant 0 : index
    %114 = vector.load %arg3[%c144_47, %c0_48] : memref<272x128xf32, #tpu.memory_space<vmem>>, vector<1x16xf32>
    %c152 = arith.constant 152 : index
    %c0_49 = arith.constant 0 : index
    %115 = vector.load %arg3[%c152, %c0_49] : memref<272x128xf32, #tpu.memory_space<vmem>>, vector<1x16xf32>
    %c160 = arith.constant 160 : index
    %c0_50 = arith.constant 0 : index
    %116 = vector.load %arg3[%c160, %c0_50] : memref<272x128xf32, #tpu.memory_space<vmem>>, vector<1x16xf32>
    %117 = vector.broadcast %114 : vector<1x16xf32> to vector<4x16xf32>
    %118 = arith.addf %113, %117 : vector<4x16xf32>
    %cst_51 = arith.constant 0.000000e+00 : f32
    %119 = vector.broadcast %cst_51 : f32 to vector<4x16xf32>
    %120 = arith.maximumf %118, %119 : vector<4x16xf32>
    %cst_52 = arith.constant dense<0.000000e+00> : vector<16xf32>
    %121 = vector.multi_reduction <add>, %120, %cst_52 [0] : vector<4x16xf32> to vector<16xf32>
    %122 = vector.shape_cast %121 : vector<16xf32> to vector<1x16xf32>
    %123 = arith.mulf %120, %120 : vector<4x16xf32>
    %cst_53 = arith.constant dense<0.000000e+00> : vector<16xf32>
    %124 = vector.multi_reduction <add>, %123, %cst_53 [0] : vector<4x16xf32> to vector<16xf32>
    %125 = vector.shape_cast %124 : vector<16xf32> to vector<1x16xf32>
    %c168 = arith.constant 168 : index
    %c0_54 = arith.constant 0 : index
    %126 = vector.load %arg3[%c168, %c0_54] : memref<272x128xf32, #tpu.memory_space<vmem>>, vector<16x16xf32>
    %127 = tpu.concatenate %122, %125 in 0 : vector<1x16xf32>, vector<1x16xf32> -> vector<2x16xf32>
    %cst_55 = arith.constant dense<0.000000e+00> : vector<2x16xf32>
    %128 = tpu.matmul %127, %126, %cst_55 {dimension_numbers = #tpu.dot_dimension_numbers<[1], [0], [0], [1], [0, 0, 1, 1], [], []>} : vector<2x16xf32>, vector<16x16xf32>, vector<2x16xf32> -> vector<2x16xf32>
    %129 = vector.extract_strided_slice %128 {offsets = [0, 0], sizes = [1, 16], strides = [1, 1]} : vector<2x16xf32> to vector<1x16xf32>
    %130 = vector.extract_strided_slice %128 {offsets = [1, 0], sizes = [1, 16], strides = [1, 1]} : vector<2x16xf32> to vector<1x16xf32>
    %131 = arith.mulf %129, %129 : vector<1x16xf32>
    %132 = arith.subf %130, %131 : vector<1x16xf32>
    %cst_56 = arith.constant 0.000000e+00 : f32
    %133 = vector.broadcast %cst_56 : f32 to vector<1x16xf32>
    %134 = arith.maximumf %132, %133 : vector<1x16xf32>
    %cst_57 = arith.constant 9.99999974E-6 : f32
    %135 = vector.broadcast %cst_57 : f32 to vector<1x16xf32>
    %136 = arith.addf %134, %135 : vector<1x16xf32>
    %137 = math.rsqrt %136 : vector<1x16xf32>
    %138 = arith.mulf %115, %137 : vector<1x16xf32>
    %139 = arith.mulf %129, %138 : vector<1x16xf32>
    %140 = arith.subf %116, %139 : vector<1x16xf32>
    %141 = vector.broadcast %138 : vector<1x16xf32> to vector<4x16xf32>
    %142 = arith.mulf %120, %141 : vector<4x16xf32>
    %143 = vector.broadcast %140 : vector<1x16xf32> to vector<4x16xf32>
    %144 = arith.addf %142, %143 : vector<4x16xf32>
    %c544 = arith.constant 544 : index
    %c0_58 = arith.constant 0 : index
    %145 = vector.load %arg2[%c544, %c0_58] : memref<848x128xbf16, #tpu.memory_space<vmem>>, vector<24x4xbf16>
    %146 = arith.truncf %144 : vector<4x16xf32> to vector<4x16xbf16>
    %cst_59 = arith.constant dense<0.000000e+00> : vector<24x16xf32>
    %147 = tpu.matmul %145, %146, %cst_59 {dimension_numbers = #tpu.dot_dimension_numbers<[1], [0], [0], [1], [0, 0, 1, 1], [], []>} : vector<24x4xbf16>, vector<4x16xbf16>, vector<24x16xf32> -> vector<24x16xf32>
    %c576 = arith.constant 576 : index
    %c0_60 = arith.constant 0 : index
    %148 = vector.load %arg2[%c576, %c0_60] : memref<848x128xbf16, #tpu.memory_space<vmem>>, vector<16x8xbf16>
    %149 = vector.extract_strided_slice %147 {offsets = [0, 0], sizes = [2, 16], strides = [1, 1]} : vector<24x16xf32> to vector<2x16xf32>
    %150 = arith.truncf %149 : vector<2x16xf32> to vector<2x16xbf16>
    %cst_61 = arith.constant dense<0.000000e+00> : vector<2x8xf32>
    %151 = tpu.matmul %150, %148, %cst_61 {dimension_numbers = #tpu.dot_dimension_numbers<[1], [0], [0], [1], [0, 0, 1, 1], [], []>} : vector<2x16xbf16>, vector<16x8xbf16>, vector<2x8xf32> -> vector<2x8xf32>
    %c592 = arith.constant 592 : index
    %c0_62 = arith.constant 0 : index
    %152 = vector.load %arg2[%c592, %c0_62] : memref<848x128xbf16, #tpu.memory_space<vmem>>, vector<16x8xbf16>
    %153 = vector.extract_strided_slice %147 {offsets = [8, 0], sizes = [2, 16], strides = [1, 1]} : vector<24x16xf32> to vector<2x16xf32>
    %154 = arith.truncf %153 : vector<2x16xf32> to vector<2x16xbf16>
    %cst_63 = arith.constant dense<0.000000e+00> : vector<2x8xf32>
    %155 = tpu.matmul %154, %152, %cst_63 {dimension_numbers = #tpu.dot_dimension_numbers<[1], [0], [0], [1], [0, 0, 1, 1], [], []>} : vector<2x16xbf16>, vector<16x8xbf16>, vector<2x8xf32> -> vector<2x8xf32>
    %156 = arith.addf %151, %155 : vector<2x8xf32>
    %c608 = arith.constant 608 : index
    %c0_64 = arith.constant 0 : index
    %157 = vector.load %arg2[%c608, %c0_64] : memref<848x128xbf16, #tpu.memory_space<vmem>>, vector<16x8xbf16>
    %158 = vector.extract_strided_slice %147 {offsets = [16, 0], sizes = [2, 16], strides = [1, 1]} : vector<24x16xf32> to vector<2x16xf32>
    %159 = arith.truncf %158 : vector<2x16xf32> to vector<2x16xbf16>
    %cst_65 = arith.constant dense<0.000000e+00> : vector<2x8xf32>
    %160 = tpu.matmul %159, %157, %cst_65 {dimension_numbers = #tpu.dot_dimension_numbers<[1], [0], [0], [1], [0, 0, 1, 1], [], []>} : vector<2x16xbf16>, vector<16x8xbf16>, vector<2x8xf32> -> vector<2x8xf32>
    %161 = arith.addf %156, %160 : vector<2x8xf32>
    %c184 = arith.constant 184 : index
    %c0_66 = arith.constant 0 : index
    %162 = vector.load %arg3[%c184, %c0_66] : memref<272x128xf32, #tpu.memory_space<vmem>>, vector<1x8xf32>
    %c192_67 = arith.constant 192 : index
    %c0_68 = arith.constant 0 : index
    %163 = vector.load %arg3[%c192_67, %c0_68] : memref<272x128xf32, #tpu.memory_space<vmem>>, vector<1x8xf32>
    %c200 = arith.constant 200 : index
    %c0_69 = arith.constant 0 : index
    %164 = vector.load %arg3[%c200, %c0_69] : memref<272x128xf32, #tpu.memory_space<vmem>>, vector<1x8xf32>
    %165 = vector.broadcast %162 : vector<1x8xf32> to vector<2x8xf32>
    %166 = arith.addf %161, %165 : vector<2x8xf32>
    %cst_70 = arith.constant 0.000000e+00 : f32
    %167 = vector.broadcast %cst_70 : f32 to vector<2x8xf32>
    %168 = arith.maximumf %166, %167 : vector<2x8xf32>
    %cst_71 = arith.constant dense<0.000000e+00> : vector<8xf32>
    %169 = vector.multi_reduction <add>, %168, %cst_71 [0] : vector<2x8xf32> to vector<8xf32>
    %170 = vector.shape_cast %169 : vector<8xf32> to vector<1x8xf32>
    %171 = arith.mulf %168, %168 : vector<2x8xf32>
    %cst_72 = arith.constant dense<0.000000e+00> : vector<8xf32>
    %172 = vector.multi_reduction <add>, %171, %cst_72 [0] : vector<2x8xf32> to vector<8xf32>
    %173 = vector.shape_cast %172 : vector<8xf32> to vector<1x8xf32>
    %cst_73 = arith.constant 5.000000e-01 : f32
    %174 = vector.broadcast %cst_73 : f32 to vector<1x8xf32>
    %175 = arith.mulf %170, %174 : vector<1x8xf32>
    %cst_74 = arith.constant 5.000000e-01 : f32
    %176 = vector.broadcast %cst_74 : f32 to vector<1x8xf32>
    %177 = arith.mulf %173, %176 : vector<1x8xf32>
    %178 = arith.mulf %175, %175 : vector<1x8xf32>
    %179 = arith.subf %177, %178 : vector<1x8xf32>
    %cst_75 = arith.constant 0.000000e+00 : f32
    %180 = vector.broadcast %cst_75 : f32 to vector<1x8xf32>
    %181 = arith.maximumf %179, %180 : vector<1x8xf32>
    %cst_76 = arith.constant 9.99999974E-6 : f32
    %182 = vector.broadcast %cst_76 : f32 to vector<1x8xf32>
    %183 = arith.addf %181, %182 : vector<1x8xf32>
    %184 = math.rsqrt %183 : vector<1x8xf32>
    %185 = arith.mulf %163, %184 : vector<1x8xf32>
    %186 = arith.mulf %175, %185 : vector<1x8xf32>
    %187 = arith.subf %164, %186 : vector<1x8xf32>
    %188 = vector.broadcast %185 : vector<1x8xf32> to vector<2x8xf32>
    %189 = arith.mulf %168, %188 : vector<2x8xf32>
    %190 = vector.broadcast %187 : vector<1x8xf32> to vector<2x8xf32>
    %191 = arith.addf %189, %190 : vector<2x8xf32>
    %c0_77 = arith.constant 0 : index
    %c0_78 = arith.constant 0 : index
    %192 = vector.load %arg1[%c0_77, %c0_78] : memref<2x24xf32, #tpu.memory_space<vmem>>, vector<2x24xf32>
    %193 = tpu.concatenate %191, %192 in 1 : vector<2x8xf32>, vector<2x24xf32> -> vector<2x32xf32>
    %194 = arith.truncf %193 : vector<2x32xf32> to vector<2x32xbf16>
    %c624 = arith.constant 624 : index
    %c0_79 = arith.constant 0 : index
    %195 = vector.load %arg2[%c624, %c0_79] : memref<848x128xbf16, #tpu.memory_space<vmem>>, vector<32x32xbf16>
    %c216 = arith.constant 216 : index
    %c0_80 = arith.constant 0 : index
    %196 = vector.load %arg3[%c216, %c0_80] : memref<272x128xf32, #tpu.memory_space<vmem>>, vector<1x32xf32>
    %cst_81 = arith.constant dense<0.000000e+00> : vector<2x32xf32>
    %197 = tpu.matmul %194, %195, %cst_81 {dimension_numbers = #tpu.dot_dimension_numbers<[1], [0], [0], [1], [0, 0, 1, 1], [], []>} : vector<2x32xbf16>, vector<32x32xbf16>, vector<2x32xf32> -> vector<2x32xf32>
    %198 = vector.broadcast %196 : vector<1x32xf32> to vector<2x32xf32>
    %199 = arith.addf %197, %198 : vector<2x32xf32>
    %cst_82 = arith.constant 0.000000e+00 : f32
    %200 = vector.broadcast %cst_82 : f32 to vector<2x32xf32>
    %201 = arith.maximumf %199, %200 : vector<2x32xf32>
    %c656 = arith.constant 656 : index
    %c0_83 = arith.constant 0 : index
    %202 = vector.load %arg2[%c656, %c0_83] : memref<848x128xbf16, #tpu.memory_space<vmem>>, vector<32x32xbf16>
    %c224_84 = arith.constant 224 : index
    %c0_85 = arith.constant 0 : index
    %203 = vector.load %arg3[%c224_84, %c0_85] : memref<272x128xf32, #tpu.memory_space<vmem>>, vector<1x32xf32>
    %204 = arith.truncf %201 : vector<2x32xf32> to vector<2x32xbf16>
    %cst_86 = arith.constant dense<0.000000e+00> : vector<2x32xf32>
    %205 = tpu.matmul %204, %202, %cst_86 {dimension_numbers = #tpu.dot_dimension_numbers<[1], [0], [0], [1], [0, 0, 1, 1], [], []>} : vector<2x32xbf16>, vector<32x32xbf16>, vector<2x32xf32> -> vector<2x32xf32>
    %206 = vector.broadcast %203 : vector<1x32xf32> to vector<2x32xf32>
    %207 = arith.addf %205, %206 : vector<2x32xf32>
    %cst_87 = arith.constant 0.000000e+00 : f32
    %208 = vector.broadcast %cst_87 : f32 to vector<2x32xf32>
    %209 = arith.maximumf %207, %208 : vector<2x32xf32>
    %c688 = arith.constant 688 : index
    %c0_88 = arith.constant 0 : index
    %210 = vector.load %arg2[%c688, %c0_88] : memref<848x128xbf16, #tpu.memory_space<vmem>>, vector<32x32xbf16>
    %c232 = arith.constant 232 : index
    %c0_89 = arith.constant 0 : index
    %211 = vector.load %arg3[%c232, %c0_89] : memref<272x128xf32, #tpu.memory_space<vmem>>, vector<1x32xf32>
    %212 = arith.truncf %209 : vector<2x32xf32> to vector<2x32xbf16>
    %cst_90 = arith.constant dense<0.000000e+00> : vector<2x32xf32>
    %213 = tpu.matmul %212, %210, %cst_90 {dimension_numbers = #tpu.dot_dimension_numbers<[1], [0], [0], [1], [0, 0, 1, 1], [], []>} : vector<2x32xbf16>, vector<32x32xbf16>, vector<2x32xf32> -> vector<2x32xf32>
    %214 = vector.broadcast %211 : vector<1x32xf32> to vector<2x32xf32>
    %215 = arith.addf %213, %214 : vector<2x32xf32>
    %cst_91 = arith.constant 0.000000e+00 : f32
    %216 = vector.broadcast %cst_91 : f32 to vector<2x32xf32>
    %217 = arith.maximumf %215, %216 : vector<2x32xf32>
    %c720 = arith.constant 720 : index
    %c0_92 = arith.constant 0 : index
    %218 = vector.load %arg2[%c720, %c0_92] : memref<848x128xbf16, #tpu.memory_space<vmem>>, vector<32x32xbf16>
    %c240 = arith.constant 240 : index
    %c0_93 = arith.constant 0 : index
    %219 = vector.load %arg3[%c240, %c0_93] : memref<272x128xf32, #tpu.memory_space<vmem>>, vector<1x32xf32>
    %220 = arith.truncf %217 : vector<2x32xf32> to vector<2x32xbf16>
    %cst_94 = arith.constant dense<0.000000e+00> : vector<2x32xf32>
    %221 = tpu.matmul %220, %218, %cst_94 {dimension_numbers = #tpu.dot_dimension_numbers<[1], [0], [0], [1], [0, 0, 1, 1], [], []>} : vector<2x32xbf16>, vector<32x32xbf16>, vector<2x32xf32> -> vector<2x32xf32>
    %222 = vector.broadcast %219 : vector<1x32xf32> to vector<2x32xf32>
    %223 = arith.addf %221, %222 : vector<2x32xf32>
    %cst_95 = arith.constant 0.000000e+00 : f32
    %224 = vector.broadcast %cst_95 : f32 to vector<2x32xf32>
    %225 = arith.maximumf %223, %224 : vector<2x32xf32>
    %c752 = arith.constant 752 : index
    %c0_96 = arith.constant 0 : index
    %226 = vector.load %arg2[%c752, %c0_96] : memref<848x128xbf16, #tpu.memory_space<vmem>>, vector<32x32xbf16>
    %c248 = arith.constant 248 : index
    %c0_97 = arith.constant 0 : index
    %227 = vector.load %arg3[%c248, %c0_97] : memref<272x128xf32, #tpu.memory_space<vmem>>, vector<1x32xf32>
    %228 = arith.truncf %225 : vector<2x32xf32> to vector<2x32xbf16>
    %cst_98 = arith.constant dense<0.000000e+00> : vector<2x32xf32>
    %229 = tpu.matmul %228, %226, %cst_98 {dimension_numbers = #tpu.dot_dimension_numbers<[1], [0], [0], [1], [0, 0, 1, 1], [], []>} : vector<2x32xbf16>, vector<32x32xbf16>, vector<2x32xf32> -> vector<2x32xf32>
    %230 = vector.broadcast %227 : vector<1x32xf32> to vector<2x32xf32>
    %231 = arith.addf %229, %230 : vector<2x32xf32>
    %cst_99 = arith.constant 0.000000e+00 : f32
    %232 = vector.broadcast %cst_99 : f32 to vector<2x32xf32>
    %233 = arith.maximumf %231, %232 : vector<2x32xf32>
    %c784 = arith.constant 784 : index
    %c0_100 = arith.constant 0 : index
    %234 = vector.load %arg2[%c784, %c0_100] : memref<848x128xbf16, #tpu.memory_space<vmem>>, vector<32x32xbf16>
    %c256 = arith.constant 256 : index
    %c0_101 = arith.constant 0 : index
    %235 = vector.load %arg3[%c256, %c0_101] : memref<272x128xf32, #tpu.memory_space<vmem>>, vector<1x32xf32>
    %236 = arith.truncf %233 : vector<2x32xf32> to vector<2x32xbf16>
    %cst_102 = arith.constant dense<0.000000e+00> : vector<2x32xf32>
    %237 = tpu.matmul %236, %234, %cst_102 {dimension_numbers = #tpu.dot_dimension_numbers<[1], [0], [0], [1], [0, 0, 1, 1], [], []>} : vector<2x32xbf16>, vector<32x32xbf16>, vector<2x32xf32> -> vector<2x32xf32>
    %238 = vector.broadcast %235 : vector<1x32xf32> to vector<2x32xf32>
    %239 = arith.addf %237, %238 : vector<2x32xf32>
    %cst_103 = arith.constant 0.000000e+00 : f32
    %240 = vector.broadcast %cst_103 : f32 to vector<2x32xf32>
    %241 = arith.maximumf %239, %240 : vector<2x32xf32>
    %c816 = arith.constant 816 : index
    %c0_104 = arith.constant 0 : index
    %242 = vector.load %arg2[%c816, %c0_104] : memref<848x128xbf16, #tpu.memory_space<vmem>>, vector<32x10xbf16>
    %c264 = arith.constant 264 : index
    %c0_105 = arith.constant 0 : index
    %243 = vector.load %arg3[%c264, %c0_105] : memref<272x128xf32, #tpu.memory_space<vmem>>, vector<1x10xf32>
    %244 = arith.truncf %241 : vector<2x32xf32> to vector<2x32xbf16>
    %cst_106 = arith.constant dense<0.000000e+00> : vector<2x10xf32>
    %245 = tpu.matmul %244, %242, %cst_106 {dimension_numbers = #tpu.dot_dimension_numbers<[1], [0], [0], [1], [0, 0, 1, 1], [], []>} : vector<2x32xbf16>, vector<32x10xbf16>, vector<2x10xf32> -> vector<2x10xf32>
    %246 = vector.broadcast %243 : vector<1x10xf32> to vector<2x10xf32>
    %247 = arith.addf %245, %246 : vector<2x10xf32>
    %c0_107 = arith.constant 0 : index
    %c0_108 = arith.constant 0 : index
    %248 = vector.load %arg4[%c0_107, %c0_108] : memref<2x10xf32, #tpu.memory_space<vmem>>, vector<2x10xf32>
    tpu.vector_store %arg4[%c0_107, %c0_108], %247 {strides = array<i32>} : memref<2x10xf32, #tpu.memory_space<vmem>>, vector<2x10xf32>,
    return
  }
}

</mosaic_0001>

<llo_original>
// kernel: _forward.1
$region0: #{_forward.1}
  #allocation0 [shape = 'u32[]', space=smem, size = 0x4, offset = 0x4, fixed_abs, tag = 'smem constant byte address 0x4 - core index']
  #allocation1 [shape = 'u32[144,128]{1,0:T(1,128)}', space=vmem, size = 0x12000, scoped, tag = 'internal scratch']
  %s0 = inlined_call_operand.vmem [shape: f32[32,48], index: 0, kind: input, shape index: {}]
  %s1 = inlined_call_operand.vmem [shape: f32[2,24], index: 1, kind: input, shape index: {}]
  %s2 = inlined_call_operand.vmem [shape: bf16[848,128], index: 2, kind: input, shape index: {}]
  %s3 = inlined_call_operand.hbm [shape: f32[272,128], index: 3, kind: input, shape index: {}]
  %s4 = inlined_call_operand.hbm [shape: f32[2,10], index: 4, kind: output, shape index: {}]
  %s5 = sld [smem:[#allocation0]]
  $region30: #{_forward.1} parent=0
    _
  %s7 = ssub.s32 1, %s5
  %s8 = scalar_select 0, %s7, %s5
  $region1: #{_forward.1} parent=0
    #allocation2 [shape = 'u8[139264]{0}', space=vmem, size = 0x22000, scoped, tag = 'input window, operand 3, single buffered']
    #allocation3 [shape = 's32[1]{0}', space=sflag, size = 0x4, scoped, tag = 'scoped memory for _forward.1']
    #allocation4 [shape = 's32[1]{0}', space=sflag, size = 0x4, scoped, tag = 'scoped memory for _forward.1']
    #allocation5 [shape = 'u8[1024]{0}', space=vmem, size = 0x400, scoped, tag = 'output window, operand 0, single buffered']
    %9 = vsyncpa [#allocation3], 0
    %10 = vsyncpa [#allocation4], 0
    // Predicated region
    $region2: #{_forward.1} parent=1 // pred_check
      _
    $region3: #{_forward.1} parent=1 // pred_check_branch
      %12 = sbr.rel (0) target = $region5
    $region4: #{_forward.1} parent=1 // pred_region
      _
    $region5: #{_forward.1} parent=1 // pred_fallthru
      _
    // Predicated region
    $region6: #{_forward.1} parent=1 // pred_check
      _
    $region7: #{_forward.1} parent=1 // pred_check_branch
      %14 = sbr.rel (0) target = $region9
    $region8: #{_forward.1} parent=1 // pred_region
      _
    $region9: #{_forward.1} parent=1 // pred_fallthru
      _
    // Predicated region
    $region10: #{_forward.1} parent=1 // pred_check
      _
    $region11: #{_forward.1} parent=1 // pred_check_branch
      %16 = sbr.rel (0) target = $region13
    $region12: #{_forward.1} parent=1 // pred_region
      _
    $region13: #{_forward.1} parent=1 // pred_fallthru
      _
    // Predicated region
    $region14: #{_forward.1} parent=1 // pred_check
      _
    $region15: #{_forward.1} parent=1 // pred_check_branch
      %18 = sbr.rel (0) target = $region17
    $region16: #{_forward.1} parent=1 // pred_region
      %s20 = ssub.s32 4352, 4352
      %21 = vsyncadd [#allocation3], %s20
      %s22 = sshll.u32 [#allocation2], 4
      %s23 = int_to_ptr.vmem [resolvable:$true] %s22
      %28 = dma.hbm_to_vmem [thread:$0]  %s3, 4352, %s23, [#allocation3], 128, 128, 8
    $region17: #{_forward.1} parent=1 // pred_fallthru
      _
    // Predicated region
    $region18: #{_forward.1} parent=1 // pred_check
      _
    $region19: #{_forward.1} parent=1 // pred_check_branch
      %30 = sbr.rel (0) target = $region21
    $region20: #{_forward.1} parent=1 // pred_region
      %31 = dma.done [#allocation3], 4352
    $region21: #{_forward.1} parent=1 // pred_fallthru
      _
    %v33 = vld [vmem:[%s0] sm:$0xff]
    %v34 = vld [vmem:[%s0 + $0x8] sm:$0xff]
    %v35 = vld [vmem:[%s0 + $0x10] sm:$0xff]
    %v36 = vld [vmem:[%s0 + $0x18] sm:$0xff]
    %v37 = vld [vmem:[%s2] sm:$0xf]
    %v38 = vld [vmem:[%s2 + $0x4] sm:$0xf]
    %v39 = vld [vmem:[%s2 + $0x8] sm:$0xf]
    %v40 = vld [vmem:[%s2 + $0xc] sm:$0xf]
    %v41 = vld [vmem:[%s2 + $0x10] sm:$0xf]
    %v42 = vld [vmem:[%s2 + $0x14] sm:$0xf]
    %v43 = vpack.c.bf16 %v34, %v33
    %v44 = vpack.c.bf16 %v36, %v35
    %v51 = vunpack.c.l.b16 %v37
    %v52 = vunpack.c.l.b16 %v38
    %v53 = vunpack.c.l.b16 %v39
    %v54 = vunpack.c.l.b16 %v40
    %v55 = vunpack.c.l.b16 %v41
    %v56 = vunpack.c.l.b16 %v42
    %v57 = vpack.c.b16 %v52, %v51
    %v58 = vpack.c.b16 %v54, %v53
    %v59 = vpack.c.b16 %v56, %v55
    %vm60 = vcmask 261120
    %v62 = vsel %vm60, %v57, 0
    %v65 = vsel %vm60, %v58, 0
    %v68 = vsel %vm60, %v59, 0
    %70 = vmatprep.subr.bf16.mxu0 0
    %71 = vmatpush1.bf16.msra.mxu0 %v43
    %72 = vmatprep.subr.bf16.mxu0 0
    %73 = vmatpush1.bf16.msra.mxu0 %v44
    %74 = vmatprep.subr.bf16.mxu0 0
    %75 = vmatpush1.bf16.msra.mxu0 0
    %76 = vmatprep.subr.bf16.mxu0 0
    %77 = vmatpush1.bf16.msra.mxu0 0
    %78 = vmatprep.subr.bf16.mxu0 0
    %79 = vmatpush1.bf16.msra.mxu0 0
    %80 = vmatprep.subr.bf16.mxu0 0
    %81 = vmatpush1.bf16.msra.mxu0 0
    %82 = vmatprep.subr.bf16.mxu0 0
    %83 = vmatpush1.bf16.msra.mxu0 0
    %84 = vmatprep.subr.bf16.mxu0 0
    %85 = vmatpush1.bf16.msra.mxu0 0
    %86 = vmatprep.subr.bf16.mxu0 0
    %87 = vmatpush1.bf16.msra.mxu0 0
    %88 = vmatprep.subr.bf16.mxu0 0
    %89 = vmatpush1.bf16.msra.mxu0 0
    %90 = vmatprep.subr.bf16.mxu0 0
    %91 = vmatpush1.bf16.msra.mxu0 0
    %92 = vmatprep.subr.bf16.mxu0 0
    %93 = vmatpush1.bf16.msra.mxu0 0
    %94 = vmatprep.subr.bf16.mxu0 0
    %95 = vmatpush1.bf16.msra.mxu0 0
    %96 = vmatprep.subr.bf16.mxu0 0
    %97 = vmatpush1.bf16.msra.mxu0 0
    %98 = vmatprep.subr.bf16.mxu0 0
    %99 = vmatpush1.bf16.msra.mxu0 0
    %100 = vmatprep.subr.bf16.mxu0 0
    %101 = vmatpush1.bf16.msra.mxu0 0
    %102 = vmatprep.mubr.bf16.mxu0 0
    %103 = vmatmul.mubr.bf16.gmra.mrb[0].mxu0 %v62
    %v104 = vpop.f32.mrb[0].mxu0
    %v105 = vadd.f32 0.0, %v104
    %v106 = vpop.f32.mrb[0].mxu0
    %v107 = vpop.f32.mrb[0].mxu0
    %v108 = vadd.f32 0.0, %v107
    %v109 = vpop.f32.mrb[0].mxu0
    %110 = vmatprep.mubr.bf16.mxu0 0
    %111 = vmatmul.mubr.bf16.gmra.mrb[0].mxu0 %v65
    %v112 = vpop.f32.mrb[0].mxu0
    %v113 = vadd.f32 0.0, %v112
    %v114 = vpop.f32.mrb[0].mxu0
    %v115 = vpop.f32.mrb[0].mxu0
    %v116 = vadd.f32 0.0, %v115
    %v117 = vpop.f32.mrb[0].mxu0
    %118 = vmatprep.mubr.bf16.mxu0 0
    %119 = vmatmul.mubr.bf16.gmra.mrb[0].mxu0 %v68
    %v120 = vpop.f32.mrb[0].mxu0
    %v121 = vadd.f32 0.0, %v120
    %v122 = vpop.f32.mrb[0].mxu0
    %v123 = vpop.f32.mrb[0].mxu0
    %v124 = vadd.f32 0.0, %v123
    %v125 = vpop.f32.mrb[0].mxu0
    %126 = vdwg.mxu0
    %v127 = vld [vmem:[%s2 + $0x18] sm:$0xf]
    %v128 = vld [vmem:[%s2 + $0x1c] sm:$0xf]
    %v129 = vld [vmem:[%s2 + $0x20] sm:$0xf]
    %v130 = vld [vmem:[%s2 + $0x24] sm:$0xf]
    %v131 = vld [vmem:[%s2 + $0x28] sm:$0xf]
    %v132 = vld [vmem:[%s2 + $0x2c] sm:$0xf]
    %v133 = vpack.c.bf16 %v108, %v105
    %v134 = vld [vmem:[%s2 + $0x30] sm:$0xf]
    %v135 = vld [vmem:[%s2 + $0x34] sm:$0xf]
    %v136 = vld [vmem:[%s2 + $0x38] sm:$0xf]
    %v137 = vld [vmem:[%s2 + $0x3c] sm:$0xf]
    %v138 = vld [vmem:[%s2 + $0x40] sm:$0xf]
    %v139 = vld [vmem:[%s2 + $0x44] sm:$0xf]
    %v140 = vpack.c.bf16 %v116, %v113
    %v147 = vunpack.c.l.b16 %v134
    %v148 = vunpack.c.l.b16 %v135
    %v149 = vunpack.c.l.b16 %v136
    %v150 = vunpack.c.l.b16 %v137
    %v151 = vunpack.c.l.b16 %v138
    %v152 = vunpack.c.l.b16 %v139
    %v153 = vpack.c.b16 %v148, %v147
    %v154 = vpack.c.b16 %v150, %v149
    %v155 = vpack.c.b16 %v152, %v151
    %vm159 = vcmask 392192
    %v161 = vsel %vm159, %v140, 0
    %163 = vmatprep.subr.bf16.mxu0 0
    %164 = vmatpush1.bf16.msra.mxu0 %v153
    %165 = vmatprep.subr.bf16.mxu0 0
    %166 = vmatpush1.bf16.msra.mxu0 %v154
    %167 = vmatprep.subr.bf16.mxu0 0
    %168 = vmatpush1.bf16.msra.mxu0 %v155
    %169 = vmatprep.subr.bf16.mxu0 0
    %170 = vmatpush1.bf16.msra.mxu0 0
    %171 = vmatprep.subr.bf16.mxu0 0
    %172 = vmatpush1.bf16.msra.mxu0 0
    %173 = vmatprep.subr.bf16.mxu0 0
    %174 = vmatpush1.bf16.msra.mxu0 0
    %175 = vmatprep.subr.bf16.mxu0 0
    %176 = vmatpush1.bf16.msra.mxu0 0
    %177 = vmatprep.subr.bf16.mxu0 0
    %178 = vmatpush1.bf16.msra.mxu0 0
    %179 = vmatprep.subr.bf16.mxu0 0
    %180 = vmatpush1.bf16.msra.mxu0 0
    %181 = vmatprep.subr.bf16.mxu0 0
    %182 = vmatpush1.bf16.msra.mxu0 0
    %183 = vmatprep.subr.bf16.mxu0 0
    %184 = vmatpush1.bf16.msra.mxu0 0
    %185 = vmatprep.subr.bf16.mxu0 0
    %186 = vmatpush1.bf16.msra.mxu0 0
    %187 = vmatprep.subr.bf16.mxu0 0
    %188 = vmatpush1.bf16.msra.mxu0 0
    %189 = vmatprep.subr.bf16.mxu0 0
    %190 = vmatpush1.bf16.msra.mxu0 0
    %191 = vmatprep.subr.bf16.mxu0 0
    %192 = vmatpush1.bf16.msra.mxu0 0
    %193 = vmatprep.subr.bf16.mxu0 0
    %194 = vmatpush1.bf16.msra.mxu0 0
    %195 = vmatprep.mubr.bf16.mxu0 0
    %196 = vmatmul.mubr.bf16.gmra.mrb[0].mxu0 %v161
    %v197 = vpop.f32.mrb[0].mxu0
    %v198 = vadd.f32 0.0, %v197
    %v199 = vpop.f32.mrb[0].mxu0
    %v200 = vpop.f32.mrb[0].mxu0
    %v201 = vadd.f32 0.0, %v200
    %v202 = vpop.f32.mrb[0].mxu0
    %203 = vdwg.mxu0
    %v210 = vunpack.c.l.b16 %v127
    %v211 = vunpack.c.l.b16 %v128
    %v212 = vunpack.c.l.b16 %v129
    %v213 = vunpack.c.l.b16 %v130
    %v214 = vunpack.c.l.b16 %v131
    %v215 = vunpack.c.l.b16 %v132
    %v216 = vpack.c.b16 %v211, %v210
    %v217 = vpack.c.b16 %v213, %v212
    %v218 = vpack.c.b16 %v215, %v214
    %v223 = vsel %vm159, %v133, 0
    %225 = vmatprep.subr.bf16.mxu0 0
    %226 = vmatpush1.bf16.msra.mxu0 %v216
    %227 = vmatprep.subr.bf16.mxu0 0
    %228 = vmatpush1.bf16.msra.mxu0 %v217
    %229 = vmatprep.subr.bf16.mxu0 0
    %230 = vmatpush1.bf16.msra.mxu0 %v218
    %231 = vmatprep.subr.bf16.mxu0 0
    %232 = vmatpush1.bf16.msra.mxu0 0
    %233 = vmatprep.subr.bf16.mxu0 0
    %234 = vmatpush1.bf16.msra.mxu0 0
    %235 = vmatprep.subr.bf16.mxu0 0
    %236 = vmatpush1.bf16.msra.mxu0 0
    %237 = vmatprep.subr.bf16.mxu0 0
    %238 = vmatpush1.bf16.msra.mxu0 0
    %239 = vmatprep.subr.bf16.mxu0 0
    %240 = vmatpush1.bf16.msra.mxu0 0
    %241 = vmatprep.subr.bf16.mxu0 0
    %242 = vmatpush1.bf16.msra.mxu0 0
    %243 = vmatprep.subr.bf16.mxu0 0
    %244 = vmatpush1.bf16.msra.mxu0 0
    %245 = vmatprep.subr.bf16.mxu0 0
    %246 = vmatpush1.bf16.msra.mxu0 0
    %247 = vmatprep.subr.bf16.mxu0 0
    %248 = vmatpush1.bf16.msra.mxu0 0
    %249 = vmatprep.subr.bf16.mxu0 0
    %250 = vmatpush1.bf16.msra.mxu0 0
    %251 = vmatprep.subr.bf16.mxu0 0
    %252 = vmatpush1.bf16.msra.mxu0 0
    %253 = vmatprep.subr.bf16.mxu0 0
    %254 = vmatpush1.bf16.msra.mxu0 0
    %255 = vmatprep.subr.bf16.mxu0 0
    %256 = vmatpush1.bf16.msra.mxu0 0
    %257 = vmatprep.mubr.bf16.mxu0 0
    %258 = vmatmul.mubr.bf16.gmra.mrb[0].mxu0 %v223
    %v259 = vpop.f32.mrb[0].mxu0
    %v260 = vadd.f32 %v198, %v259
    %v261 = vpop.f32.mrb[0].mxu0
    %v262 = vpop.f32.mrb[0].mxu0
    %v263 = vadd.f32 %v201, %v262
    %v264 = vpop.f32.mrb[0].mxu0
    %265 = vdwg.mxu0
    %v266 = vld [vmem:[%s2 + $0x48] sm:$0xf]
    %v267 = vld [vmem:[%s2 + $0x4c] sm:$0xf]
    %v268 = vld [vmem:[%s2 + $0x50] sm:$0xf]
    %v269 = vld [vmem:[%s2 + $0x54] sm:$0xf]
    %v270 = vld [vmem:[%s2 + $0x58] sm:$0xf]
    %v271 = vld [vmem:[%s2 + $0x5c] sm:$0xf]
    %v272 = vpack.c.bf16 %v124, %v121
    %v279 = vunpack.c.l.b16 %v266
    %v280 = vunpack.c.l.b16 %v267
    %v281 = vunpack.c.l.b16 %v268
    %v282 = vunpack.c.l.b16 %v269
    %v283 = vunpack.c.l.b16 %v270
    %v284 = vunpack.c.l.b16 %v271
    %v285 = vpack.c.b16 %v280, %v279
    %v286 = vpack.c.b16 %v282, %v281
    %v287 = vpack.c.b16 %v284, %v283
    %v292 = vsel %vm159, %v272, 0
    %294 = vmatprep.subr.bf16.mxu0 0
    %295 = vmatpush1.bf16.msra.mxu0 %v285
    %296 = vmatprep.subr.bf16.mxu0 0
    %297 = vmatpush1.bf16.msra.mxu0 %v286
    %298 = vmatprep.subr.bf16.mxu0 0
    %299 = vmatpush1.bf16.msra.mxu0 %v287
    %300 = vmatprep.subr.bf16.mxu0 0
    %301 = vmatpush1.bf16.msra.mxu0 0
    %302 = vmatprep.subr.bf16.mxu0 0
    %303 = vmatpush1.bf16.msra.mxu0 0
    %304 = vmatprep.subr.bf16.mxu0 0
    %305 = vmatpush1.bf16.msra.mxu0 0
    %306 = vmatprep.subr.bf16.mxu0 0
    %307 = vmatpush1.bf16.msra.mxu0 0
    %308 = vmatprep.subr.bf16.mxu0 0
    %309 = vmatpush1.bf16.msra.mxu0 0
    %310 = vmatprep.subr.bf16.mxu0 0
    %311 = vmatpush1.bf16.msra.mxu0 0
    %312 = vmatprep.subr.bf16.mxu0 0
    %313 = vmatpush1.bf16.msra.mxu0 0
    %314 = vmatprep.subr.bf16.mxu0 0
    %315 = vmatpush1.bf16.msra.mxu0 0
    %316 = vmatprep.subr.bf16.mxu0 0
    %317 = vmatpush1.bf16.msra.mxu0 0
    %318 = vmatprep.subr.bf16.mxu0 0
    %319 = vmatpush1.bf16.msra.mxu0 0
    %320 = vmatprep.subr.bf16.mxu0 0
    %321 = vmatpush1.bf16.msra.mxu0 0
    %322 = vmatprep.subr.bf16.mxu0 0
    %323 = vmatpush1.bf16.msra.mxu0 0
    %324 = vmatprep.subr.bf16.mxu0 0
    %325 = vmatpush1.bf16.msra.mxu0 0
    %326 = vmatprep.mubr.bf16.mxu0 0
    %327 = vmatmul.mubr.bf16.gmra.mrb[0].mxu0 %v292
    %v328 = vpop.f32.mrb[0].mxu0
    %v329 = vadd.f32 0.0, %v328
    %v330 = vpop.f32.mrb[0].mxu0
    %v331 = vpop.f32.mrb[0].mxu0
    %v332 = vadd.f32 0.0, %v331
    %v333 = vpop.f32.mrb[0].mxu0
    %334 = vdwg.mxu0
    %v335 = vadd.f32 %v260, %v329
    %v336 = vadd.f32 %v263, %v332
    %v337 = vld [vmem:[#allocation2] sm:$0x1]
    %v338 = vld [vmem:[#allocation2 + $0x8] sm:$0x1]
    %v339 = vld [vmem:[#allocation2 + $0x10] sm:$0x1]
    %v340 = vlaneseq
    %v341 = vshrl.u32 %v340, 7
    %v342 = vsub.s32 0, %v341
    %v343 = vrot.slane %v337, %v342
    %v344 = vadd.f32 %v335, %v343
    %v345 = vadd.f32 %v336, %v343
    %v346 = vmax.f32 %v344, 0.0
    %v347 = vmax.f32 %v345, 0.0
    %vm348 = vcmask 523264
    %v349 = vsel %vm348, %v346, 0.0
    %v350 = vsel %vm348, %v347, 0.0
    %v351 = vadd.f32 %v349, %v350
    %v352 = vrot.slane %v351, 4
    %v353 = vadd.f32 %v351, %v352
    %v354 = vrot.slane %v353, 2
    %v355 = vadd.f32 %v353, %v354
    %v356 = vrot.slane %v355, 1
    %v357 = vadd.f32 %v355, %v356
    %v358 = vmul.f32 %v346, %v346
    %v359 = vmul.f32 %v347, %v347
    %v360 = vsel %vm348, %v358, 0.0
    %v361 = vsel %vm348, %v359, 0.0
    %v362 = vadd.f32 %v360, %v361
    %v363 = vrot.slane %v362, 4
    %v364 = vadd.f32 %v362, %v363
    %v365 = vrot.slane %v364, 2
    %v366 = vadd.f32 %v364, %v365
    %v367 = vrot.slane %v366, 1
    %v368 = vadd.f32 %v366, %v367
    %v369 = vld [vmem:[#allocation2 + $0x18] sm:$0xff]
    %v370 = vld [vmem:[#allocation2 + $0x20] sm:$0xff]
    %v371 = vld [vmem:[#allocation2 + $0x28] sm:$0xff]
    %v372 = vld [vmem:[#allocation2 + $0x30] sm:$0xff]
    %v373 = vld [vmem:[#allocation2 + $0x38] sm:$0xff]
    %v374 = vld [vmem:[#allocation2 + $0x40] sm:$0xff]
    %v375 = vld [vmem:[#allocation2 + $0x48] sm:$0xff]
    %v376 = vld [vmem:[#allocation2 + $0x50] sm:$0xff]
    %vm377 = vcmask 1040384
    %v378 = vsel %vm377, %v357, %v368
    %v380 = vsel %vm348, %v378, 0
    %382 = vmatprep.subr.mxu0 0.0
    %383 = vmatpush1.msra.mxu0 %v369
    %384 = vmatprep.subr.mxu0 0.0
    %385 = vmatpush1.msra.mxu0 %v370
    %386 = vmatprep.subr.mxu0 0.0
    %387 = vmatpush1.msra.mxu0 %v371
    %388 = vmatprep.subr.mxu0 0.0
    %389 = vmatpush1.msra.mxu0 %v372
    %390 = vmatprep.subr.mxu0 0.0
    %391 = vmatpush1.msra.mxu0 %v373
    %392 = vmatprep.subr.mxu0 0.0
    %393 = vmatpush1.msra.mxu0 %v374
    %394 = vmatprep.subr.mxu0 0.0
    %395 = vmatpush1.msra.mxu0 %v375
    %396 = vmatprep.subr.mxu0 0.0
    %397 = vmatpush1.msra.mxu0 %v376
    %398 = vmatprep.subr.mxu0 0.0
    %399 = vmatpush1.msra.mxu0 0.0
    %400 = vmatprep.subr.mxu0 0.0
    %401 = vmatpush1.msra.mxu0 0.0
    %402 = vmatprep.subr.mxu0 0.0
    %403 = vmatpush1.msra.mxu0 0.0
    %404 = vmatprep.subr.mxu0 0.0
    %405 = vmatpush1.msra.mxu0 0.0
    %406 = vmatprep.subr.mxu0 0.0
    %407 = vmatpush1.msra.mxu0 0.0
    %408 = vmatprep.subr.mxu0 0.0
    %409 = vmatpush1.msra.mxu0 0.0
    %410 = vmatprep.subr.mxu0 0.0
    %411 = vmatpush1.msra.mxu0 0.0
    %412 = vmatprep.subr.mxu0 0.0
    %413 = vmatpush1.msra.mxu0 0.0
    %414 = vmatprep.subr.mxu0 0.0
    %415 = vmatpush1.msra.mxu0 0.0
    %416 = vmatprep.subr.mxu0 0.0
    %417 = vmatpush1.msra.mxu0 0.0
    %418 = vmatprep.subr.mxu0 0.0
    %419 = vmatpush1.msra.mxu0 0.0
    %420 = vmatprep.subr.mxu0 0.0
    %421 = vmatpush1.msra.mxu0 0.0
    %422 = vmatprep.subr.mxu0 0.0
    %423 = vmatpush1.msra.mxu0 0.0
    %424 = vmatprep.subr.mxu0 0.0
    %425 = vmatpush1.msra.mxu0 0.0
    %426 = vmatprep.subr.mxu0 0.0
    %427 = vmatpush1.msra.mxu0 0.0
    %428 = vmatprep.subr.mxu0 0.0
    %429 = vmatpush1.msra.mxu0 0.0
    %430 = vmatprep.subr.mxu0 0.0
    %431 = vmatpush1.msra.mxu0 0.0
    %432 = vmatprep.subr.mxu0 0.0
    %433 = vmatpush1.msra.mxu0 0.0
    %434 = vmatprep.subr.mxu0 0.0
    %435 = vmatpush1.msra.mxu0 0.0
    %436 = vmatprep.subr.mxu0 0.0
    %437 = vmatpush1.msra.mxu0 0.0
    %438 = vmatprep.subr.mxu0 0.0
    %439 = vmatpush1.msra.mxu0 0.0
    %440 = vmatprep.subr.mxu0 0.0
    %441 = vmatpush1.msra.mxu0 0.0
    %442 = vmatprep.subr.mxu0 0.0
    %443 = vmatpush1.msra.mxu0 0.0
    %444 = vmatprep.subr.mxu0 0.0
    %445 = vmatpush1.msra.mxu0 0.0
    %446 = vmatprep.mubr.f32.mxu0 0.0
    %447 = vmatmul.mubr.f32.gmra.mrb[0].mxu0 %v380
    %v448 = vpop.f32.mrb[0].mxu0
    %v449 = vadd.f32 0.0, %v448
    %v450 = vpop.f32.mrb[0].mxu0
    %451 = vdwg.mxu0
    %v452 = vmul.f32 %v449, %v449
    %v454 = vrot.slane %v452, 7
    %v456 = vsub.f32 %v449, %v454
    %v457 = vmax.f32 %v456, 0.0
    %v458 = vadd.f32 %v457, 1e-05
    %v459 = vrsqrt.pop %v458
    %v461 = vrot.slane %v459, 1
    %v463 = vmul.f32 %v338, %v461
    %v464 = vmul.f32 %v449, %v463
    %v465 = vsub.f32 %v339, %v464
    %v466 = vlaneseq
    %v467 = vshrl.u32 %v466, 7
    %v468 = vsub.s32 0, %v467
    %v469 = vrot.slane %v463, %v468
    %v470 = vmul.f32 %v346, %v469
    %v471 = vmul.f32 %v347, %v469
    %v472 = vlaneseq
    %v473 = vshrl.u32 %v472, 7
    %v474 = vsub.s32 0, %v473
    %v475 = vrot.slane %v465, %v474
    %v476 = vadd.f32 %v470, %v475
    %v477 = vadd.f32 %v471, %v475
    %v478 = vld [vmem:[%s2 + $0x60] sm:$0xf]
    %v479 = vld [vmem:[%s2 + $0x64] sm:$0xf]
    %v480 = vld [vmem:[%s2 + $0x68] sm:$0xf]
    %v481 = vpack.c.bf16 %v477, %v476
    %v485 = vunpack.c.l.b16 %v478
    %v486 = vunpack.c.l.b16 %v479
    %v487 = vunpack.c.l.b16 %v480
    %v488 = vpack.c.b16 %v486, %v485
    %v489 = vpack.c.b16 %v487, %v487
    %vm490 = vcmask 130048
    %v492 = vsel %vm490, %v488, 0
    %v495 = vsel %vm490, %v489, 0
    %497 = vmatprep.subr.bf16.mxu0 0
    %498 = vmatpush1.bf16.msra.mxu0 %v481
    %499 = vmatprep.subr.bf16.mxu0 0
    %500 = vmatpush1.bf16.msra.mxu0 0
    %501 = vmatprep.subr.bf16.mxu0 0
    %502 = vmatpush1.bf16.msra.mxu0 0
    %503 = vmatprep.subr.bf16.mxu0 0
    %504 = vmatpush1.bf16.msra.mxu0 0
    %505 = vmatprep.subr.bf16.mxu0 0
    %506 = vmatpush1.bf16.msra.mxu0 0
    %507 = vmatprep.subr.bf16.mxu0 0
    %508 = vmatpush1.bf16.msra.mxu0 0
    %509 = vmatprep.subr.bf16.mxu0 0
    %510 = vmatpush1.bf16.msra.mxu0 0
    %511 = vmatprep.subr.bf16.mxu0 0
    %512 = vmatpush1.bf16.msra.mxu0 0
    %513 = vmatprep.subr.bf16.mxu0 0
    %514 = vmatpush1.bf16.msra.mxu0 0
    %515 = vmatprep.subr.bf16.mxu0 0
    %516 = vmatpush1.bf16.msra.mxu0 0
    %517 = vmatprep.subr.bf16.mxu0 0
    %518 = vmatpush1.bf16.msra.mxu0 0
    %519 = vmatprep.subr.bf16.mxu0 0
    %520 = vmatpush1.bf16.msra.mxu0 0
    %521 = vmatprep.subr.bf16.mxu0 0
    %522 = vmatpush1.bf16.msra.mxu0 0
    %523 = vmatprep.subr.bf16.mxu0 0
    %524 = vmatpush1.bf16.msra.mxu0 0
    %525 = vmatprep.subr.bf16.mxu0 0
    %526 = vmatpush1.bf16.msra.mxu0 0
    %527 = vmatprep.subr.bf16.mxu0 0
    %528 = vmatpush1.bf16.msra.mxu0 0
    %529 = vmatprep.mubr.bf16.mxu0 0
    %530 = vmatmul.mubr.bf16.gmra.mrb[0].mxu0 %v492
    %v531 = vpop.f32.mrb[0].mxu0
    %v532 = vadd.f32 0.0, %v531
    %v533 = vpop.f32.mrb[0].mxu0
    %v534 = vpop.f32.mrb[0].mxu0
    %v535 = vadd.f32 0.0, %v534
    %v536 = vpop.f32.mrb[0].mxu0
    %537 = vmatprep.mubr.bf16.mxu0 0
    %538 = vmatmul.mubr.bf16.gmra.mrb[0].mxu0 %v495
    %v539 = vpop.f32.mrb[0].mxu0
    %v540 = vadd.f32 0.0, %v539
    %v541 = vpop.f32.mrb[0].mxu0
    %v542 = vpop.f32.mrb[0].mxu0
    %v543 = vpop.f32.mrb[0].mxu0
    %544 = vdwg.mxu0
    %v545 = vld [vmem:[%s2 + $0x70] sm:$0xf]
    %v546 = vld [vmem:[%s2 + $0x74] sm:$0xf]
    %v547 = vld [vmem:[%s2 + $0x78] sm:$0xf]
    %v548 = vld [vmem:[%s2 + $0x7c] sm:$0xf]
    %v549 = vld [vmem:[%s2 + $0x80] sm:$0xf]
    %v550 = vld [vmem:[%s2 + $0x84] sm:$0xf]
    %v551 = vld [vmem:[%s2 + $0x88] sm:$0xf]
    %v552 = vld [vmem:[%s2 + $0x8c] sm:$0xf]
    %v553 = vpack.c.bf16 %v532, %v532
    %v554 = vld [vmem:[%s2 + $0x90] sm:$0xf]
    %v555 = vld [vmem:[%s2 + $0x94] sm:$0xf]
    %v556 = vld [vmem:[%s2 + $0x98] sm:$0xf]
    %v557 = vld [vmem:[%s2 + $0x9c] sm:$0xf]
    %v558 = vld [vmem:[%s2 + $0xa0] sm:$0xf]
    %v559 = vld [vmem:[%s2 + $0xa4] sm:$0xf]
    %v560 = vld [vmem:[%s2 + $0xa8] sm:$0xf]
    %v561 = vld [vmem:[%s2 + $0xac] sm:$0xf]
    %v562 = vpack.c.bf16 %v535, %v535
    %v571 = vunpack.c.l.b16 %v554
    %v572 = vunpack.c.l.b16 %v555
    %v573 = vunpack.c.l.b16 %v556
    %v574 = vunpack.c.l.b16 %v557
    %v575 = vunpack.c.l.b16 %v558
    %v576 = vunpack.c.l.b16 %v559
    %v577 = vunpack.c.l.b16 %v560
    %v578 = vunpack.c.l.b16 %v561
    %v579 = vpack.c.b16 %v572, %v571
    %v580 = vpack.c.b16 %v574, %v573
    %v581 = vpack.c.b16 %v576, %v575
    %v582 = vpack.c.b16 %v578, %v577
    %v588 = vsel %vm348, %v562, 0
    %590 = vmatprep.subr.bf16.mxu0 0
    %591 = vmatpush1.bf16.msra.mxu0 %v579
    %592 = vmatprep.subr.bf16.mxu0 0
    %593 = vmatpush1.bf16.msra.mxu0 %v580
    %594 = vmatprep.subr.bf16.mxu0 0
    %595 = vmatpush1.bf16.msra.mxu0 %v581
    %596 = vmatprep.subr.bf16.mxu0 0
    %597 = vmatpush1.bf16.msra.mxu0 %v582
    %598 = vmatprep.subr.bf16.mxu0 0
    %599 = vmatpush1.bf16.msra.mxu0 0
    %600 = vmatprep.subr.bf16.mxu0 0
    %601 = vmatpush1.bf16.msra.mxu0 0
    %602 = vmatprep.subr.bf16.mxu0 0
    %603 = vmatpush1.bf16.msra.mxu0 0
    %604 = vmatprep.subr.bf16.mxu0 0
    %605 = vmatpush1.bf16.msra.mxu0 0
    %606 = vmatprep.subr.bf16.mxu0 0
    %607 = vmatpush1.bf16.msra.mxu0 0
    %608 = vmatprep.subr.bf16.mxu0 0
    %609 = vmatpush1.bf16.msra.mxu0 0
    %610 = vmatprep.subr.bf16.mxu0 0
    %611 = vmatpush1.bf16.msra.mxu0 0
    %612 = vmatprep.subr.bf16.mxu0 0
    %613 = vmatpush1.bf16.msra.mxu0 0
    %614 = vmatprep.subr.bf16.mxu0 0
    %615 = vmatpush1.bf16.msra.mxu0 0
    %616 = vmatprep.subr.bf16.mxu0 0
    %617 = vmatpush1.bf16.msra.mxu0 0
    %618 = vmatprep.subr.bf16.mxu0 0
    %619 = vmatpush1.bf16.msra.mxu0 0
    %620 = vmatprep.subr.bf16.mxu0 0
    %621 = vmatpush1.bf16.msra.mxu0 0
    %622 = vmatprep.mubr.bf16.mxu0 0
    %623 = vmatmul.mubr.bf16.gmra.mrb[0].mxu0 %v588
    %v624 = vpop.f32.mrb[0].mxu0
    %v625 = vadd.f32 0.0, %v624
    %v626 = vpop.f32.mrb[0].mxu0
    %v627 = vpop.f32.mrb[0].mxu0
    %v628 = vpop.f32.mrb[0].mxu0
    %629 = vdwg.mxu0
    %v638 = vunpack.c.l.b16 %v545
    %v639 = vunpack.c.l.b16 %v546
    %v640 = vunpack.c.l.b16 %v547
    %v641 = vunpack.c.l.b16 %v548
    %v642 = vunpack.c.l.b16 %v549
    %v643 = vunpack.c.l.b16 %v550
    %v644 = vunpack.c.l.b16 %v551
    %v645 = vunpack.c.l.b16 %v552
    %v646 = vpack.c.b16 %v639, %v638
    %v647 = vpack.c.b16 %v641, %v640
    %v648 = vpack.c.b16 %v643, %v642
    %v649 = vpack.c.b16 %v645, %v644
    %v655 = vsel %vm348, %v553, 0
    %657 = vmatprep.subr.bf16.mxu0 0
    %658 = vmatpush1.bf16.msra.mxu0 %v646
    %659 = vmatprep.subr.bf16.mxu0 0
    %660 = vmatpush1.bf16.msra.mxu0 %v647
    %661 = vmatprep.subr.bf16.mxu0 0
    %662 = vmatpush1.bf16.msra.mxu0 %v648
    %663 = vmatprep.subr.bf16.mxu0 0
    %664 = vmatpush1.bf16.msra.mxu0 %v649
    %665 = vmatprep.subr.bf16.mxu0 0
    %666 = vmatpush1.bf16.msra.mxu0 0
    %667 = vmatprep.subr.bf16.mxu0 0
    %668 = vmatpush1.bf16.msra.mxu0 0
    %669 = vmatprep.subr.bf16.mxu0 0
    %670 = vmatpush1.bf16.msra.mxu0 0
    %671 = vmatprep.subr.bf16.mxu0 0
    %672 = vmatpush1.bf16.msra.mxu0 0
    %673 = vmatprep.subr.bf16.mxu0 0
    %674 = vmatpush1.bf16.msra.mxu0 0
    %675 = vmatprep.subr.bf16.mxu0 0
    %676 = vmatpush1.bf16.msra.mxu0 0
    %677 = vmatprep.subr.bf16.mxu0 0
    %678 = vmatpush1.bf16.msra.mxu0 0
    %679 = vmatprep.subr.bf16.mxu0 0
    %680 = vmatpush1.bf16.msra.mxu0 0
    %681 = vmatprep.subr.bf16.mxu0 0
    %682 = vmatpush1.bf16.msra.mxu0 0
    %683 = vmatprep.subr.bf16.mxu0 0
    %684 = vmatpush1.bf16.msra.mxu0 0
    %685 = vmatprep.subr.bf16.mxu0 0
    %686 = vmatpush1.bf16.msra.mxu0 0
    %687 = vmatprep.subr.bf16.mxu0 0
    %688 = vmatpush1.bf16.msra.mxu0 0
    %689 = vmatprep.mubr.bf16.mxu0 0
    %690 = vmatmul.mubr.bf16.gmra.mrb[0].mxu0 %v655
    %v691 = vpop.f32.mrb[0].mxu0
    %v692 = vadd.f32 %v625, %v691
    %v693 = vpop.f32.mrb[0].mxu0
    %v694 = vpop.f32.mrb[0].mxu0
    %v695 = vpop.f32.mrb[0].mxu0
    %696 = vdwg.mxu0
    %v697 = vld [vmem:[%s2 + $0xb0] sm:$0xf]
    %v698 = vld [vmem:[%s2 + $0xb4] sm:$0xf]
    %v699 = vld [vmem:[%s2 + $0xb8] sm:$0xf]
    %v700 = vld [vmem:[%s2 + $0xbc] sm:$0xf]
    %v701 = vld [vmem:[%s2 + $0xc0] sm:$0xf]
    %v702 = vld [vmem:[%s2 + $0xc4] sm:$0xf]
    %v703 = vld [vmem:[%s2 + $0xc8] sm:$0xf]
    %v704 = vld [vmem:[%s2 + $0xcc] sm:$0xf]
    %v705 = vpack.c.bf16 %v540, %v540
    %v714 = vunpack.c.l.b16 %v697
    %v715 = vunpack.c.l.b16 %v698
    %v716 = vunpack.c.l.b16 %v699
    %v717 = vunpack.c.l.b16 %v700
    %v718 = vunpack.c.l.b16 %v701
    %v719 = vunpack.c.l.b16 %v702
    %v720 = vunpack.c.l.b16 %v703
    %v721 = vunpack.c.l.b16 %v704
    %v722 = vpack.c.b16 %v715, %v714
    %v723 = vpack.c.b16 %v717, %v716
    %v724 = vpack.c.b16 %v719, %v718
    %v725 = vpack.c.b16 %v721, %v720
    %v731 = vsel %vm348, %v705, 0
    %733 = vmatprep.subr.bf16.mxu0 0
    %734 = vmatpush1.bf16.msra.mxu0 %v722
    %735 = vmatprep.subr.bf16.mxu0 0
    %736 = vmatpush1.bf16.msra.mxu0 %v723
    %737 = vmatprep.subr.bf16.mxu0 0
    %738 = vmatpush1.bf16.msra.mxu0 %v724
    %739 = vmatprep.subr.bf16.mxu0 0
    %740 = vmatpush1.bf16.msra.mxu0 %v725
    %741 = vmatprep.subr.bf16.mxu0 0
    %742 = vmatpush1.bf16.msra.mxu0 0
    %743 = vmatprep.subr.bf16.mxu0 0
    %744 = vmatpush1.bf16.msra.mxu0 0
    %745 = vmatprep.subr.bf16.mxu0 0
    %746 = vmatpush1.bf16.msra.mxu0 0
    %747 = vmatprep.subr.bf16.mxu0 0
    %748 = vmatpush1.bf16.msra.mxu0 0
    %749 = vmatprep.subr.bf16.mxu0 0
    %750 = vmatpush1.bf16.msra.mxu0 0
    %751 = vmatprep.subr.bf16.mxu0 0
    %752 = vmatpush1.bf16.msra.mxu0 0
    %753 = vmatprep.subr.bf16.mxu0 0
    %754 = vmatpush1.bf16.msra.mxu0 0
    %755 = vmatprep.subr.bf16.mxu0 0
    %756 = vmatpush1.bf16.msra.mxu0 0
    %757 = vmatprep.subr.bf16.mxu0 0
    %758 = vmatpush1.bf16.msra.mxu0 0
    %759 = vmatprep.subr.bf16.mxu0 0
    %760 = vmatpush1.bf16.msra.mxu0 0
    %761 = vmatprep.subr.bf16.mxu0 0
    %762 = vmatpush1.bf16.msra.mxu0 0
    %763 = vmatprep.subr.bf16.mxu0 0
    %764 = vmatpush1.bf16.msra.mxu0 0
    %765 = vmatprep.mubr.bf16.mxu0 0
    %766 = vmatmul.mubr.bf16.gmra.mrb[0].mxu0 %v731
    %v767 = vpop.f32.mrb[0].mxu0
    %v768 = vadd.f32 0.0, %v767
    %v769 = vpop.f32.mrb[0].mxu0
    %v770 = vpop.f32.mrb[0].mxu0
    %v771 = vpop.f32.mrb[0].mxu0
    %772 = vdwg.mxu0
    %v773 = vadd.f32 %v692, %v768
    %v774 = vld [vmem:[#allocation2 + $0x58] sm:$0x1]
    %v775 = vld [vmem:[#allocation2 + $0x60] sm:$0x1]
    %v776 = vld [vmem:[#allocation2 + $0x68] sm:$0x1]
    %v777 = vlaneseq
    %v778 = vshrl.u32 %v777, 7
    %v779 = vsub.s32 0, %v778
    %v780 = vrot.slane %v774, %v779
    %v781 = vadd.f32 %v773, %v780
    %v782 = vmax.f32 %v781, 0.0
    %v783 = vsel %vm60, %v782, 0.0
    %v784 = vrot.slane %v783, 4
    %v785 = vadd.f32 %v783, %v784
    %v786 = vrot.slane %v785, 2
    %v787 = vadd.f32 %v785, %v786
    %v788 = vrot.slane %v787, 1
    %v789 = vadd.f32 %v787, %v788
    %v790 = vmul.f32 %v782, %v782
    %v791 = vsel %vm60, %v790, 0.0
    %v792 = vrot.slane %v791, 4
    %v793 = vadd.f32 %v791, %v792
    %v794 = vrot.slane %v793, 2
    %v795 = vadd.f32 %v793, %v794
    %v796 = vrot.slane %v795, 1
    %v797 = vadd.f32 %v795, %v796
    %v798 = vld [vmem:[#allocation2 + $0x70] sm:$0xff]
    %v799 = vld [vmem:[#allocation2 + $0x78] sm:$0xff]
    %v800 = vld [vmem:[#allocation2 + $0x80] sm:$0xff]
    %v801 = vld [vmem:[#allocation2 + $0x88] sm:$0xff]
    %v802 = vsel %vm377, %v789, %v797
    %v804 = vsel %vm60, %v802, 0
    %806 = vmatprep.subr.mxu0 0.0
    %807 = vmatpush1.msra.mxu0 %v798
    %808 = vmatprep.subr.mxu0 0.0
    %809 = vmatpush1.msra.mxu0 %v799
    %810 = vmatprep.subr.mxu0 0.0
    %811 = vmatpush1.msra.mxu0 %v800
    %812 = vmatprep.subr.mxu0 0.0
    %813 = vmatpush1.msra.mxu0 %v801
    %814 = vmatprep.subr.mxu0 0.0
    %815 = vmatpush1.msra.mxu0 0.0
    %816 = vmatprep.subr.mxu0 0.0
    %817 = vmatpush1.msra.mxu0 0.0
    %818 = vmatprep.subr.mxu0 0.0
    %819 = vmatpush1.msra.mxu0 0.0
    %820 = vmatprep.subr.mxu0 0.0
    %821 = vmatpush1.msra.mxu0 0.0
    %822 = vmatprep.subr.mxu0 0.0
    %823 = vmatpush1.msra.mxu0 0.0
    %824 = vmatprep.subr.mxu0 0.0
    %825 = vmatpush1.msra.mxu0 0.0
    %826 = vmatprep.subr.mxu0 0.0
    %827 = vmatpush1.msra.mxu0 0.0
    %828 = vmatprep.subr.mxu0 0.0
    %829 = vmatpush1.msra.mxu0 0.0
    %830 = vmatprep.subr.mxu0 0.0
    %831 = vmatpush1.msra.mxu0 0.0
    %832 = vmatprep.subr.mxu0 0.0
    %833 = vmatpush1.msra.mxu0 0.0
    %834 = vmatprep.subr.mxu0 0.0
    %835 = vmatpush1.msra.mxu0 0.0
    %836 = vmatprep.subr.mxu0 0.0
    %837 = vmatpush1.msra.mxu0 0.0
    %838 = vmatprep.subr.mxu0 0.0
    %839 = vmatpush1.msra.mxu0 0.0
    %840 = vmatprep.subr.mxu0 0.0
    %841 = vmatpush1.msra.mxu0 0.0
    %842 = vmatprep.subr.mxu0 0.0
    %843 = vmatpush1.msra.mxu0 0.0
    %844 = vmatprep.subr.mxu0 0.0
    %845 = vmatpush1.msra.mxu0 0.0
    %846 = vmatprep.subr.mxu0 0.0
    %847 = vmatpush1.msra.mxu0 0.0
    %848 = vmatprep.subr.mxu0 0.0
    %849 = vmatpush1.msra.mxu0 0.0
    %850 = vmatprep.subr.mxu0 0.0
    %851 = vmatpush1.msra.mxu0 0.0
    %852 = vmatprep.subr.mxu0 0.0
    %853 = vmatpush1.msra.mxu0 0.0
    %854 = vmatprep.subr.mxu0 0.0
    %855 = vmatpush1.msra.mxu0 0.0
    %856 = vmatprep.subr.mxu0 0.0
    %857 = vmatpush1.msra.mxu0 0.0
    %858 = vmatprep.subr.mxu0 0.0
    %859 = vmatpush1.msra.mxu0 0.0
    %860 = vmatprep.subr.mxu0 0.0
    %861 = vmatpush1.msra.mxu0 0.0
    %862 = vmatprep.subr.mxu0 0.0
    %863 = vmatpush1.msra.mxu0 0.0
    %864 = vmatprep.subr.mxu0 0.0
    %865 = vmatpush1.msra.mxu0 0.0
    %866 = vmatprep.subr.mxu0 0.0
    %867 = vmatpush1.msra.mxu0 0.0
    %868 = vmatprep.subr.mxu0 0.0
    %869 = vmatpush1.msra.mxu0 0.0
    %870 = vmatprep.mubr.f32.mxu0 0.0
    %871 = vmatmul.mubr.f32.gmra.mrb[0].mxu0 %v804
    %v872 = vpop.f32.mrb[0].mxu0
    %v873 = vadd.f32 0.0, %v872
    %v874 = vpop.f32.mrb[0].mxu0
    %875 = vdwg.mxu0
    %v876 = vmul.f32 %v873, %v873
    %v878 = vrot.slane %v876, 7
    %v880 = vsub.f32 %v873, %v878
    %v881 = vmax.f32 %v880, 0.0
    %v882 = vadd.f32 %v881, 1e-05
    %v883 = vrsqrt.pop %v882
    %v885 = vrot.slane %v883, 1
    %v887 = vmul.f32 %v775, %v885
    %v888 = vmul.f32 %v873, %v887
    %v889 = vsub.f32 %v776, %v888
    %v890 = vlaneseq
    %v891 = vshrl.u32 %v890, 7
    %v892 = vsub.s32 0, %v891
    %v893 = vrot.slane %v887, %v892
    %v894 = vmul.f32 %v782, %v893
    %v895 = vlaneseq
    %v896 = vshrl.u32 %v895, 7
    %v897 = vsub.s32 0, %v896
    %v898 = vrot.slane %v889, %v897
    %v899 = vadd.f32 %v894, %v898
    %v900 = vld [vmem:[%s2 + $0xd0] sm:$0xf]
    %v901 = vld [vmem:[%s2 + $0xd4] sm:$0xf]
    %v902 = vld [vmem:[%s2 + $0xd8] sm:$0xf]
    %v903 = vpack.c.bf16 %v899, %v899
    %v907 = vunpack.c.l.b16 %v900
    %v908 = vunpack.c.l.b16 %v901
    %v909 = vunpack.c.l.b16 %v902
    %v910 = vpack.c.b16 %v908, %v907
    %v911 = vpack.c.b16 %v909, %v909
    %vm912 = vcmask 64512
    %v914 = vsel %vm912, %v910, 0
    %v917 = vsel %vm912, %v911, 0
    %vm919 = vcmask 1043456
    %v921 = vsel %vm919, %v903, 0
    %923 = vmatprep.subr.bf16.mxu0 0
    %924 = vmatpush1.bf16.msra.mxu0 %v921
    %925 = vmatprep.subr.bf16.mxu0 0
    %926 = vmatpush1.bf16.msra.mxu0 0
    %927 = vmatprep.subr.bf16.mxu0 0
    %928 = vmatpush1.bf16.msra.mxu0 0
    %929 = vmatprep.subr.bf16.mxu0 0
    %930 = vmatpush1.bf16.msra.mxu0 0
    %931 = vmatprep.subr.bf16.mxu0 0
    %932 = vmatpush1.bf16.msra.mxu0 0
    %933 = vmatprep.subr.bf16.mxu0 0
    %934 = vmatpush1.bf16.msra.mxu0 0
    %935 = vmatprep.subr.bf16.mxu0 0
    %936 = vmatpush1.bf16.msra.mxu0 0
    %937 = vmatprep.subr.bf16.mxu0 0
    %938 = vmatpush1.bf16.msra.mxu0 0
    %939 = vmatprep.subr.bf16.mxu0 0
    %940 = vmatpush1.bf16.msra.mxu0 0
    %941 = vmatprep.subr.bf16.mxu0 0
    %942 = vmatpush1.bf16.msra.mxu0 0
    %943 = vmatprep.subr.bf16.mxu0 0
    %944 = vmatpush1.bf16.msra.mxu0 0
    %945 = vmatprep.subr.bf16.mxu0 0
    %946 = vmatpush1.bf16.msra.mxu0 0
    %947 = vmatprep.subr.bf16.mxu0 0
    %948 = vmatpush1.bf16.msra.mxu0 0
    %949 = vmatprep.subr.bf16.mxu0 0
    %950 = vmatpush1.bf16.msra.mxu0 0
    %951 = vmatprep.subr.bf16.mxu0 0
    %952 = vmatpush1.bf16.msra.mxu0 0
    %953 = vmatprep.subr.bf16.mxu0 0
    %954 = vmatpush1.bf16.msra.mxu0 0
    %955 = vmatprep.mubr.bf16.mxu0 0
    %956 = vmatmul.mubr.bf16.gmra.mrb[0].mxu0 %v914
    %v957 = vpop.f32.mrb[0].mxu0
    %v958 = vadd.f32 0.0, %v957
    %v959 = vpop.f32.mrb[0].mxu0
    %v960 = vpop.f32.mrb[0].mxu0
    %v961 = vadd.f32 0.0, %v960
    %v962 = vpop.f32.mrb[0].mxu0
    %963 = vmatprep.mubr.bf16.mxu0 0
    %964 = vmatmul.mubr.bf16.gmra.mrb[0].mxu0 %v917
    %v965 = vpop.f32.mrb[0].mxu0
    %v966 = vadd.f32 0.0, %v965
    %v967 = vpop.f32.mrb[0].mxu0
    %v968 = vpop.f32.mrb[0].mxu0
    %v969 = vpop.f32.mrb[0].mxu0
    %970 = vdwg.mxu0
    %v971 = vld [vmem:[%s2 + $0xe0] sm:$0xf]
    %v972 = vld [vmem:[%s2 + $0xe4] sm:$0xf]
    %v973 = vld [vmem:[%s2 + $0xe8] sm:$0xf]
    %v974 = vld [vmem:[%s2 + $0xec] sm:$0xf]
    %v975 = vpack.c.bf16 %v958, %v958
    %v976 = vld [vmem:[%s2 + $0xf0] sm:$0xf]
    %v977 = vld [vmem:[%s2 + $0xf4] sm:$0xf]
    %v978 = vld [vmem:[%s2 + $0xf8] sm:$0xf]
    %v979 = vld [vmem:[%s2 + $0xfc] sm:$0xf]
    %v980 = vpack.c.bf16 %v961, %v961
    %v985 = vunpack.c.l.b16 %v976
    %v986 = vunpack.c.l.b16 %v977
    %v987 = vunpack.c.l.b16 %v978
    %v988 = vunpack.c.l.b16 %v979
    %v989 = vpack.c.b16 %v986, %v985
    %v990 = vpack.c.b16 %v988, %v987
    %v994 = vsel %vm60, %v980, 0
    %996 = vmatprep.subr.bf16.mxu0 0
    %997 = vmatpush1.bf16.msra.mxu0 %v989
    %998 = vmatprep.subr.bf16.mxu0 0
    %999 = vmatpush1.bf16.msra.mxu0 %v990
    %1000 = vmatprep.subr.bf16.mxu0 0
    %1001 = vmatpush1.bf16.msra.mxu0 0
    %1002 = vmatprep.subr.bf16.mxu0 0
    %1003 = vmatpush1.bf16.msra.mxu0 0
    %1004 = vmatprep.subr.bf16.mxu0 0
    %1005 = vmatpush1.bf16.msra.mxu0 0
    %1006 = vmatprep.subr.bf16.mxu0 0
    %1007 = vmatpush1.bf16.msra.mxu0 0
    %1008 = vmatprep.subr.bf16.mxu0 0
    %1009 = vmatpush1.bf16.msra.mxu0 0
    %1010 = vmatprep.subr.bf16.mxu0 0
    %1011 = vmatpush1.bf16.msra.mxu0 0
    %1012 = vmatprep.subr.bf16.mxu0 0
    %1013 = vmatpush1.bf16.msra.mxu0 0
    %1014 = vmatprep.subr.bf16.mxu0 0
    %1015 = vmatpush1.bf16.msra.mxu0 0
    %1016 = vmatprep.subr.bf16.mxu0 0
    %1017 = vmatpush1.bf16.msra.mxu0 0
    %1018 = vmatprep.subr.bf16.mxu0 0
    %1019 = vmatpush1.bf16.msra.mxu0 0
    %1020 = vmatprep.subr.bf16.mxu0 0
    %1021 = vmatpush1.bf16.msra.mxu0 0
    %1022 = vmatprep.subr.bf16.mxu0 0
    %1023 = vmatpush1.bf16.msra.mxu0 0
    %1024 = vmatprep.subr.bf16.mxu0 0
    %1025 = vmatpush1.bf16.msra.mxu0 0
    %1026 = vmatprep.subr.bf16.mxu0 0
    %1027 = vmatpush1.bf16.msra.mxu0 0
    %1028 = vmatprep.mubr.bf16.mxu0 0
    %1029 = vmatmul.mubr.bf16.gmra.mrb[0].mxu0 %v994
    %v1030 = vpop.f32.mrb[0].mxu0
    %v1031 = vadd.f32 0.0, %v1030
    %v1032 = vpop.f32.mrb[0].mxu0
    %v1033 = vpop.f32.mrb[0].mxu0
    %v1034 = vpop.f32.mrb[0].mxu0
    %1035 = vdwg.mxu0
    %v1040 = vunpack.c.l.b16 %v971
    %v1041 = vunpack.c.l.b16 %v972
    %v1042 = vunpack.c.l.b16 %v973
    %v1043 = vunpack.c.l.b16 %v974
    %v1044 = vpack.c.b16 %v1041, %v1040
    %v1045 = vpack.c.b16 %v1043, %v1042
    %v1049 = vsel %vm60, %v975, 0
    %1051 = vmatprep.subr.bf16.mxu0 0
    %1052 = vmatpush1.bf16.msra.mxu0 %v1044
    %1053 = vmatprep.subr.bf16.mxu0 0
    %1054 = vmatpush1.bf16.msra.mxu0 %v1045
    %1055 = vmatprep.subr.bf16.mxu0 0
    %1056 = vmatpush1.bf16.msra.mxu0 0
    %1057 = vmatprep.subr.bf16.mxu0 0
    %1058 = vmatpush1.bf16.msra.mxu0 0
    %1059 = vmatprep.subr.bf16.mxu0 0
    %1060 = vmatpush1.bf16.msra.mxu0 0
    %1061 = vmatprep.subr.bf16.mxu0 0
    %1062 = vmatpush1.bf16.msra.mxu0 0
    %1063 = vmatprep.subr.bf16.mxu0 0
    %1064 = vmatpush1.bf16.msra.mxu0 0
    %1065 = vmatprep.subr.bf16.mxu0 0
    %1066 = vmatpush1.bf16.msra.mxu0 0
    %1067 = vmatprep.subr.bf16.mxu0 0
    %1068 = vmatpush1.bf16.msra.mxu0 0
    %1069 = vmatprep.subr.bf16.mxu0 0
    %1070 = vmatpush1.bf16.msra.mxu0 0
    %1071 = vmatprep.subr.bf16.mxu0 0
    %1072 = vmatpush1.bf16.msra.mxu0 0
    %1073 = vmatprep.subr.bf16.mxu0 0
    %1074 = vmatpush1.bf16.msra.mxu0 0
    %1075 = vmatprep.subr.bf16.mxu0 0
    %1076 = vmatpush1.bf16.msra.mxu0 0
    %1077 = vmatprep.subr.bf16.mxu0 0
    %1078 = vmatpush1.bf16.msra.mxu0 0
    %1079 = vmatprep.subr.bf16.mxu0 0
    %1080 = vmatpush1.bf16.msra.mxu0 0
    %1081 = vmatprep.subr.bf16.mxu0 0
    %1082 = vmatpush1.bf16.msra.mxu0 0
    %1083 = vmatprep.mubr.bf16.mxu0 0
    %1084 = vmatmul.mubr.bf16.gmra.mrb[0].mxu0 %v1049
    %v1085 = vpop.f32.mrb[0].mxu0
    %v1086 = vadd.f32 %v1031, %v1085
    %v1087 = vpop.f32.mrb[0].mxu0
    %v1088 = vpop.f32.mrb[0].mxu0
    %v1089 = vpop.f32.mrb[0].mxu0
    %1090 = vdwg.mxu0
    %v1091 = vld [vmem:[%s2 + $0x100] sm:$0xf]
    %v1092 = vld [vmem:[%s2 + $0x104] sm:$0xf]
    %v1093 = vld [vmem:[%s2 + $0x108] sm:$0xf]
    %v1094 = vld [vmem:[%s2 + $0x10c] sm:$0xf]
    %v1095 = vpack.c.bf16 %v966, %v966
    %v1100 = vunpack.c.l.b16 %v1091
    %v1101 = vunpack.c.l.b16 %v1092
    %v1102 = vunpack.c.l.b16 %v1093
    %v1103 = vunpack.c.l.b16 %v1094
    %v1104 = vpack.c.b16 %v1101, %v1100
    %v1105 = vpack.c.b16 %v1103, %v1102
    %v1109 = vsel %vm60, %v1095, 0
    %1111 = vmatprep.subr.bf16.mxu0 0
    %1112 = vmatpush1.bf16.msra.mxu0 %v1104
    %1113 = vmatprep.subr.bf16.mxu0 0
    %1114 = vmatpush1.bf16.msra.mxu0 %v1105
    %1115 = vmatprep.subr.bf16.mxu0 0
    %1116 = vmatpush1.bf16.msra.mxu0 0
    %1117 = vmatprep.subr.bf16.mxu0 0
    %1118 = vmatpush1.bf16.msra.mxu0 0
    %1119 = vmatprep.subr.bf16.mxu0 0
    %1120 = vmatpush1.bf16.msra.mxu0 0
    %1121 = vmatprep.subr.bf16.mxu0 0
    %1122 = vmatpush1.bf16.msra.mxu0 0
    %1123 = vmatprep.subr.bf16.mxu0 0
    %1124 = vmatpush1.bf16.msra.mxu0 0
    %1125 = vmatprep.subr.bf16.mxu0 0
    %1126 = vmatpush1.bf16.msra.mxu0 0
    %1127 = vmatprep.subr.bf16.mxu0 0
    %1128 = vmatpush1.bf16.msra.mxu0 0
    %1129 = vmatprep.subr.bf16.mxu0 0
    %1130 = vmatpush1.bf16.msra.mxu0 0
    %1131 = vmatprep.subr.bf16.mxu0 0
    %1132 = vmatpush1.bf16.msra.mxu0 0
    %1133 = vmatprep.subr.bf16.mxu0 0
    %1134 = vmatpush1.bf16.msra.mxu0 0
    %1135 = vmatprep.subr.bf16.mxu0 0
    %1136 = vmatpush1.bf16.msra.mxu0 0
    %1137 = vmatprep.subr.bf16.mxu0 0
    %1138 = vmatpush1.bf16.msra.mxu0 0
    %1139 = vmatprep.subr.bf16.mxu0 0
    %1140 = vmatpush1.bf16.msra.mxu0 0
    %1141 = vmatprep.subr.bf16.mxu0 0
    %1142 = vmatpush1.bf16.msra.mxu0 0
    %1143 = vmatprep.mubr.bf16.mxu0 0
    %1144 = vmatmul.mubr.bf16.gmra.mrb[0].mxu0 %v1109
    %v1145 = vpop.f32.mrb[0].mxu0
    %v1146 = vadd.f32 0.0, %v1145
    %v1147 = vpop.f32.mrb[0].mxu0
    %v1148 = vpop.f32.mrb[0].mxu0
    %v1149 = vpop.f32.mrb[0].mxu0
    %1150 = vdwg.mxu0
    %v1151 = vadd.f32 %v1086, %v1146
    %v1152 = vld [vmem:[#allocation2 + $0x90] sm:$0x1]
    %v1153 = vld [vmem:[#allocation2 + $0x98] sm:$0x1]
    %v1154 = vld [vmem:[#allocation2 + $0xa0] sm:$0x1]
    %v1155 = vlaneseq
    %v1156 = vshrl.u32 %v1155, 7
    %v1157 = vsub.s32 0, %v1156
    %v1158 = vrot.slane %v1152, %v1157
    %v1159 = vadd.f32 %v1151, %v1158
    %v1160 = vmax.f32 %v1159, 0.0
    %vm1161 = vcmask 125952
    %v1162 = vsel %vm1161, %v1160, 0.0
    %v1163 = vrot.slane %v1162, 4
    %v1164 = vadd.f32 %v1162, %v1163
    %v1165 = vrot.slane %v1164, 2
    %v1166 = vadd.f32 %v1164, %v1165
    %v1167 = vrot.slane %v1166, 1
    %v1168 = vadd.f32 %v1166, %v1167
    %v1169 = vmul.f32 %v1160, %v1160
    %v1170 = vsel %vm1161, %v1169, 0.0
    %v1171 = vrot.slane %v1170, 4
    %v1172 = vadd.f32 %v1170, %v1171
    %v1173 = vrot.slane %v1172, 2
    %v1174 = vadd.f32 %v1172, %v1173
    %v1175 = vrot.slane %v1174, 1
    %v1176 = vadd.f32 %v1174, %v1175
    %v1177 = vld [vmem:[#allocation2 + $0xa8] sm:$0xff]
    %v1178 = vld [vmem:[#allocation2 + $0xb0] sm:$0xff]
    %v1179 = vsel %vm377, %v1168, %v1176
    %v1181 = vsel %vm490, %v1179, 0
    %1183 = vmatprep.subr.mxu0 0.0
    %1184 = vmatpush1.msra.mxu0 %v1177
    %1185 = vmatprep.subr.mxu0 0.0
    %1186 = vmatpush1.msra.mxu0 %v1178
    %1187 = vmatprep.subr.mxu0 0.0
    %1188 = vmatpush1.msra.mxu0 0.0
    %1189 = vmatprep.subr.mxu0 0.0
    %1190 = vmatpush1.msra.mxu0 0.0
    %1191 = vmatprep.subr.mxu0 0.0
    %1192 = vmatpush1.msra.mxu0 0.0
    %1193 = vmatprep.subr.mxu0 0.0
    %1194 = vmatpush1.msra.mxu0 0.0
    %1195 = vmatprep.subr.mxu0 0.0
    %1196 = vmatpush1.msra.mxu0 0.0
    %1197 = vmatprep.subr.mxu0 0.0
    %1198 = vmatpush1.msra.mxu0 0.0
    %1199 = vmatprep.subr.mxu0 0.0
    %1200 = vmatpush1.msra.mxu0 0.0
    %1201 = vmatprep.subr.mxu0 0.0
    %1202 = vmatpush1.msra.mxu0 0.0
    %1203 = vmatprep.subr.mxu0 0.0
    %1204 = vmatpush1.msra.mxu0 0.0
    %1205 = vmatprep.subr.mxu0 0.0
    %1206 = vmatpush1.msra.mxu0 0.0
    %1207 = vmatprep.subr.mxu0 0.0
    %1208 = vmatpush1.msra.mxu0 0.0
    %1209 = vmatprep.subr.mxu0 0.0
    %1210 = vmatpush1.msra.mxu0 0.0
    %1211 = vmatprep.subr.mxu0 0.0
    %1212 = vmatpush1.msra.mxu0 0.0
    %1213 = vmatprep.subr.mxu0 0.0
    %1214 = vmatpush1.msra.mxu0 0.0
    %1215 = vmatprep.subr.mxu0 0.0
    %1216 = vmatpush1.msra.mxu0 0.0
    %1217 = vmatprep.subr.mxu0 0.0
    %1218 = vmatpush1.msra.mxu0 0.0
    %1219 = vmatprep.subr.mxu0 0.0
    %1220 = vmatpush1.msra.mxu0 0.0
    %1221 = vmatprep.subr.mxu0 0.0
    %1222 = vmatpush1.msra.mxu0 0.0
    %1223 = vmatprep.subr.mxu0 0.0
    %1224 = vmatpush1.msra.mxu0 0.0
    %1225 = vmatprep.subr.mxu0 0.0
    %1226 = vmatpush1.msra.mxu0 0.0
    %1227 = vmatprep.subr.mxu0 0.0
    %1228 = vmatpush1.msra.mxu0 0.0
    %1229 = vmatprep.subr.mxu0 0.0
    %1230 = vmatpush1.msra.mxu0 0.0
    %1231 = vmatprep.subr.mxu0 0.0
    %1232 = vmatpush1.msra.mxu0 0.0
    %1233 = vmatprep.subr.mxu0 0.0
    %1234 = vmatpush1.msra.mxu0 0.0
    %1235 = vmatprep.subr.mxu0 0.0
    %1236 = vmatpush1.msra.mxu0 0.0
    %1237 = vmatprep.subr.mxu0 0.0
    %1238 = vmatpush1.msra.mxu0 0.0
    %1239 = vmatprep.subr.mxu0 0.0
    %1240 = vmatpush1.msra.mxu0 0.0
    %1241 = vmatprep.subr.mxu0 0.0
    %1242 = vmatpush1.msra.mxu0 0.0
    %1243 = vmatprep.subr.mxu0 0.0
    %1244 = vmatpush1.msra.mxu0 0.0
    %1245 = vmatprep.subr.mxu0 0.0
    %1246 = vmatpush1.msra.mxu0 0.0
    %1247 = vmatprep.mubr.f32.mxu0 0.0
    %1248 = vmatmul.mubr.f32.gmra.mrb[0].mxu0 %v1181
    %v1249 = vpop.f32.mrb[0].mxu0
    %v1250 = vadd.f32 0.0, %v1249
    %v1251 = vpop.f32.mrb[0].mxu0
    %1252 = vdwg.mxu0
    %v1253 = vmul.f32 %v1250, %v1250
    %v1255 = vrot.slane %v1253, 7
    %v1257 = vsub.f32 %v1250, %v1255
    %v1258 = vmax.f32 %v1257, 0.0
    %v1259 = vadd.f32 %v1258, 1e-05
    %v1260 = vrsqrt.pop %v1259
    %v1262 = vrot.slane %v1260, 1
    %v1264 = vmul.f32 %v1153, %v1262
    %v1265 = vmul.f32 %v1250, %v1264
    %v1266 = vsub.f32 %v1154, %v1265
    %v1267 = vlaneseq
    %v1268 = vshrl.u32 %v1267, 7
    %v1269 = vsub.s32 0, %v1268
    %v1270 = vrot.slane %v1264, %v1269
    %v1271 = vmul.f32 %v1160, %v1270
    %v1272 = vlaneseq
    %v1273 = vshrl.u32 %v1272, 7
    %v1274 = vsub.s32 0, %v1273
    %v1275 = vrot.slane %v1266, %v1274
    %v1276 = vadd.f32 %v1271, %v1275
    %v1277 = vld [vmem:[%s2 + $0x110] sm:$0xf]
    %v1278 = vld [vmem:[%s2 + $0x114] sm:$0xf]
    %v1279 = vld [vmem:[%s2 + $0x118] sm:$0xf]
    %v1280 = vpack.c.bf16 %v1276, %v1276
    %v1284 = vunpack.c.l.b16 %v1277
    %v1285 = vunpack.c.l.b16 %v1278
    %v1286 = vunpack.c.l.b16 %v1279
    %v1287 = vpack.c.b16 %v1285, %v1284
    %v1288 = vpack.c.b16 %v1286, %v1286
    %vm1289 = vcmask 31744
    %v1291 = vsel %vm1289, %v1287, 0
    %v1294 = vsel %vm1289, %v1288, 0
    %vm1296 = vcmask 1041408
    %v1298 = vsel %vm1296, %v1280, 0
    %1300 = vmatprep.subr.bf16.mxu0 0
    %1301 = vmatpush1.bf16.msra.mxu0 %v1298
    %1302 = vmatprep.subr.bf16.mxu0 0
    %1303 = vmatpush1.bf16.msra.mxu0 0
    %1304 = vmatprep.subr.bf16.mxu0 0
    %1305 = vmatpush1.bf16.msra.mxu0 0
    %1306 = vmatprep.subr.bf16.mxu0 0
    %1307 = vmatpush1.bf16.msra.mxu0 0
    %1308 = vmatprep.subr.bf16.mxu0 0
    %1309 = vmatpush1.bf16.msra.mxu0 0
    %1310 = vmatprep.subr.bf16.mxu0 0
    %1311 = vmatpush1.bf16.msra.mxu0 0
    %1312 = vmatprep.subr.bf16.mxu0 0
    %1313 = vmatpush1.bf16.msra.mxu0 0
    %1314 = vmatprep.subr.bf16.mxu0 0
    %1315 = vmatpush1.bf16.msra.mxu0 0
    %1316 = vmatprep.subr.bf16.mxu0 0
    %1317 = vmatpush1.bf16.msra.mxu0 0
    %1318 = vmatprep.subr.bf16.mxu0 0
    %1319 = vmatpush1.bf16.msra.mxu0 0
    %1320 = vmatprep.subr.bf16.mxu0 0
    %1321 = vmatpush1.bf16.msra.mxu0 0
    %1322 = vmatprep.subr.bf16.mxu0 0
    %1323 = vmatpush1.bf16.msra.mxu0 0
    %1324 = vmatprep.subr.bf16.mxu0 0
    %1325 = vmatpush1.bf16.msra.mxu0 0
    %1326 = vmatprep.subr.bf16.mxu0 0
    %1327 = vmatpush1.bf16.msra.mxu0 0
    %1328 = vmatprep.subr.bf16.mxu0 0
    %1329 = vmatpush1.bf16.msra.mxu0 0
    %1330 = vmatprep.subr.bf16.mxu0 0
    %1331 = vmatpush1.bf16.msra.mxu0 0
    %1332 = vmatprep.mubr.bf16.mxu0 0
    %1333 = vmatmul.mubr.bf16.gmra.mrb[0].mxu0 %v1291
    %v1334 = vpop.f32.mrb[0].mxu0
    %v1335 = vadd.f32 0.0, %v1334
    %v1336 = vpop.f32.mrb[0].mxu0
    %v1337 = vpop.f32.mrb[0].mxu0
    %v1338 = vadd.f32 0.0, %v1337
    %v1339 = vpop.f32.mrb[0].mxu0
    %1340 = vmatprep.mubr.bf16.mxu0 0
    %1341 = vmatmul.mubr.bf16.gmra.mrb[0].mxu0 %v1294
    %v1342 = vpop.f32.mrb[0].mxu0
    %v1343 = vadd.f32 0.0, %v1342
    %v1344 = vpop.f32.mrb[0].mxu0
    %v1345 = vpop.f32.mrb[0].mxu0
    %v1346 = vpop.f32.mrb[0].mxu0
    %1347 = vdwg.mxu0
    %v1348 = vld [vmem:[%s2 + $0x120] sm:$0xf]
    %v1349 = vld [vmem:[%s2 + $0x124] sm:$0xf]
    %v1350 = vpack.c.bf16 %v1335, %v1335
    %v1351 = vld [vmem:[%s2 + $0x128] sm:$0xf]
    %v1352 = vld [vmem:[%s2 + $0x12c] sm:$0xf]
    %v1353 = vpack.c.bf16 %v1338, %v1338
    %v1356 = vunpack.c.l.b16 %v1351
    %v1357 = vunpack.c.l.b16 %v1352
    %v1358 = vpack.c.b16 %v1357, %v1356
    %v1361 = vsel %vm490, %v1353, 0
    %1363 = vmatprep.subr.bf16.mxu0 0
    %1364 = vmatpush1.bf16.msra.mxu0 %v1358
    %1365 = vmatprep.subr.bf16.mxu0 0
    %1366 = vmatpush1.bf16.msra.mxu0 0
    %1367 = vmatprep.subr.bf16.mxu0 0
    %1368 = vmatpush1.bf16.msra.mxu0 0
    %1369 = vmatprep.subr.bf16.mxu0 0
    %1370 = vmatpush1.bf16.msra.mxu0 0
    %1371 = vmatprep.subr.bf16.mxu0 0
    %1372 = vmatpush1.bf16.msra.mxu0 0
    %1373 = vmatprep.subr.bf16.mxu0 0
    %1374 = vmatpush1.bf16.msra.mxu0 0
    %1375 = vmatprep.subr.bf16.mxu0 0
    %1376 = vmatpush1.bf16.msra.mxu0 0
    %1377 = vmatprep.subr.bf16.mxu0 0
    %1378 = vmatpush1.bf16.msra.mxu0 0
    %1379 = vmatprep.subr.bf16.mxu0 0
    %1380 = vmatpush1.bf16.msra.mxu0 0
    %1381 = vmatprep.subr.bf16.mxu0 0
    %1382 = vmatpush1.bf16.msra.mxu0 0
    %1383 = vmatprep.subr.bf16.mxu0 0
    %1384 = vmatpush1.bf16.msra.mxu0 0
    %1385 = vmatprep.subr.bf16.mxu0 0
    %1386 = vmatpush1.bf16.msra.mxu0 0
    %1387 = vmatprep.subr.bf16.mxu0 0
    %1388 = vmatpush1.bf16.msra.mxu0 0
    %1389 = vmatprep.subr.bf16.mxu0 0
    %1390 = vmatpush1.bf16.msra.mxu0 0
    %1391 = vmatprep.subr.bf16.mxu0 0
    %1392 = vmatpush1.bf16.msra.mxu0 0
    %1393 = vmatprep.subr.bf16.mxu0 0
    %1394 = vmatpush1.bf16.msra.mxu0 0
    %1395 = vmatprep.mubr.bf16.mxu0 0
    %1396 = vmatmul.mubr.bf16.gmra.mrb[0].mxu0 %v1361
    %v1397 = vpop.f32.mrb[0].mxu0
    %v1398 = vadd.f32 0.0, %v1397
    %v1399 = vpop.f32.mrb[0].mxu0
    %v1400 = vpop.f32.mrb[0].mxu0
    %v1401 = vpop.f32.mrb[0].mxu0
    %1402 = vdwg.mxu0
    %v1405 = vunpack.c.l.b16 %v1348
    %v1406 = vunpack.c.l.b16 %v1349
    %v1407 = vpack.c.b16 %v1406, %v1405
    %v1410 = vsel %vm490, %v1350, 0
    %1412 = vmatprep.subr.bf16.mxu0 0
    %1413 = vmatpush1.bf16.msra.mxu0 %v1407
    %1414 = vmatprep.subr.bf16.mxu0 0
    %1415 = vmatpush1.bf16.msra.mxu0 0
    %1416 = vmatprep.subr.bf16.mxu0 0
    %1417 = vmatpush1.bf16.msra.mxu0 0
    %1418 = vmatprep.subr.bf16.mxu0 0
    %1419 = vmatpush1.bf16.msra.mxu0 0
    %1420 = vmatprep.subr.bf16.mxu0 0
    %1421 = vmatpush1.bf16.msra.mxu0 0
    %1422 = vmatprep.subr.bf16.mxu0 0
    %1423 = vmatpush1.bf16.msra.mxu0 0
    %1424 = vmatprep.subr.bf16.mxu0 0
    %1425 = vmatpush1.bf16.msra.mxu0 0
    %1426 = vmatprep.subr.bf16.mxu0 0
    %1427 = vmatpush1.bf16.msra.mxu0 0
    %1428 = vmatprep.subr.bf16.mxu0 0
    %1429 = vmatpush1.bf16.msra.mxu0 0
    %1430 = vmatprep.subr.bf16.mxu0 0
    %1431 = vmatpush1.bf16.msra.mxu0 0
    %1432 = vmatprep.subr.bf16.mxu0 0
    %1433 = vmatpush1.bf16.msra.mxu0 0
    %1434 = vmatprep.subr.bf16.mxu0 0
    %1435 = vmatpush1.bf16.msra.mxu0 0
    %1436 = vmatprep.subr.bf16.mxu0 0
    %1437 = vmatpush1.bf16.msra.mxu0 0
    %1438 = vmatprep.subr.bf16.mxu0 0
    %1439 = vmatpush1.bf16.msra.mxu0 0
    %1440 = vmatprep.subr.bf16.mxu0 0
    %1441 = vmatpush1.bf16.msra.mxu0 0
    %1442 = vmatprep.subr.bf16.mxu0 0
    %1443 = vmatpush1.bf16.msra.mxu0 0
    %1444 = vmatprep.mubr.bf16.mxu0 0
    %1445 = vmatmul.mubr.bf16.gmra.mrb[0].mxu0 %v1410
    %v1446 = vpop.f32.mrb[0].mxu0
    %v1447 = vadd.f32 %v1398, %v1446
    %v1448 = vpop.f32.mrb[0].mxu0
    %v1449 = vpop.f32.mrb[0].mxu0
    %v1450 = vpop.f32.mrb[0].mxu0
    %1451 = vdwg.mxu0
    %v1452 = vld [vmem:[%s2 + $0x130] sm:$0xf]
    %v1453 = vld [vmem:[%s2 + $0x134] sm:$0xf]
    %v1454 = vpack.c.bf16 %v1343, %v1343
    %v1457 = vunpack.c.l.b16 %v1452
    %v1458 = vunpack.c.l.b16 %v1453
    %v1459 = vpack.c.b16 %v1458, %v1457
    %v1462 = vsel %vm490, %v1454, 0
    %1464 = vmatprep.subr.bf16.mxu0 0
    %1465 = vmatpush1.bf16.msra.mxu0 %v1459
    %1466 = vmatprep.subr.bf16.mxu0 0
    %1467 = vmatpush1.bf16.msra.mxu0 0
    %1468 = vmatprep.subr.bf16.mxu0 0
    %1469 = vmatpush1.bf16.msra.mxu0 0
    %1470 = vmatprep.subr.bf16.mxu0 0
    %1471 = vmatpush1.bf16.msra.mxu0 0
    %1472 = vmatprep.subr.bf16.mxu0 0
    %1473 = vmatpush1.bf16.msra.mxu0 0
    %1474 = vmatprep.subr.bf16.mxu0 0
    %1475 = vmatpush1.bf16.msra.mxu0 0
    %1476 = vmatprep.subr.bf16.mxu0 0
    %1477 = vmatpush1.bf16.msra.mxu0 0
    %1478 = vmatprep.subr.bf16.mxu0 0
    %1479 = vmatpush1.bf16.msra.mxu0 0
    %1480 = vmatprep.subr.bf16.mxu0 0
    %1481 = vmatpush1.bf16.msra.mxu0 0
    %1482 = vmatprep.subr.bf16.mxu0 0
    %1483 = vmatpush1.bf16.msra.mxu0 0
    %1484 = vmatprep.subr.bf16.mxu0 0
    %1485 = vmatpush1.bf16.msra.mxu0 0
    %1486 = vmatprep.subr.bf16.mxu0 0
    %1487 = vmatpush1.bf16.msra.mxu0 0
    %1488 = vmatprep.subr.bf16.mxu0 0
    %1489 = vmatpush1.bf16.msra.mxu0 0
    %1490 = vmatprep.subr.bf16.mxu0 0
    %1491 = vmatpush1.bf16.msra.mxu0 0
    %1492 = vmatprep.subr.bf16.mxu0 0
    %1493 = vmatpush1.bf16.msra.mxu0 0
    %1494 = vmatprep.subr.bf16.mxu0 0
    %1495 = vmatpush1.bf16.msra.mxu0 0
    %1496 = vmatprep.mubr.bf16.mxu0 0
    %1497 = vmatmul.mubr.bf16.gmra.mrb[0].mxu0 %v1462
    %v1498 = vpop.f32.mrb[0].mxu0
    %v1499 = vadd.f32 0.0, %v1498
    %v1500 = vpop.f32.mrb[0].mxu0
    %v1501 = vpop.f32.mrb[0].mxu0
    %v1502 = vpop.f32.mrb[0].mxu0
    %1503 = vdwg.mxu0
    %v1504 = vadd.f32 %v1447, %v1499
    %v1505 = vld [vmem:[#allocation2 + $0xb8] sm:$0x1]
    %v1506 = vld [vmem:[#allocation2 + $0xc0] sm:$0x1]
    %v1507 = vld [vmem:[#allocation2 + $0xc8] sm:$0x1]
    %v1508 = vlaneseq
    %v1509 = vshrl.u32 %v1508, 7
    %v1510 = vsub.s32 0, %v1509
    %v1511 = vrot.slane %v1505, %v1510
    %v1512 = vadd.f32 %v1504, %v1511
    %v1513 = vmax.f32 %v1512, 0.0
    %vm1514 = vcmask 58368
    %v1515 = vsel %vm1514, %v1513, 0.0
    %v1516 = vrot.slane %v1515, 4
    %v1517 = vadd.f32 %v1515, %v1516
    %v1518 = vrot.slane %v1517, 2
    %v1519 = vadd.f32 %v1517, %v1518
    %v1520 = vrot.slane %v1519, 1
    %v1521 = vadd.f32 %v1519, %v1520
    %v1522 = vmul.f32 %v1513, %v1513
    %v1523 = vsel %vm1514, %v1522, 0.0
    %v1524 = vrot.slane %v1523, 4
    %v1525 = vadd.f32 %v1523, %v1524
    %v1526 = vrot.slane %v1525, 2
    %v1527 = vadd.f32 %v1525, %v1526
    %v1528 = vrot.slane %v1527, 1
    %v1529 = vadd.f32 %v1527, %v1528
    %v1530 = vmul.f32 %v1521, 0.5
    %v1531 = vmul.f32 %v1529, 0.5
    %v1532 = vmul.f32 %v1530, %v1530
    %v1533 = vsub.f32 %v1531, %v1532
    %v1534 = vmax.f32 %v1533, 0.0
    %v1535 = vadd.f32 %v1534, 1e-05
    %v1536 = vrsqrt.pop %v1535
    %v1537 = vmul.f32 %v1506, %v1536
    %v1538 = vmul.f32 %v1530, %v1537
    %v1539 = vsub.f32 %v1507, %v1538
    %v1540 = vlaneseq
    %v1541 = vshrl.u32 %v1540, 7
    %v1542 = vsub.s32 0, %v1541
    %v1543 = vrot.slane %v1537, %v1542
    %v1544 = vmul.f32 %v1513, %v1543
    %v1545 = vlaneseq
    %v1546 = vshrl.u32 %v1545, 7
    %v1547 = vsub.s32 0, %v1546
    %v1548 = vrot.slane %v1539, %v1547
    %v1549 = vadd.f32 %v1544, %v1548
    %v1550 = vld [vmem:[%s1] sm:$0x3]
    %1552 = vrot.lane.b32.xlu0 %v1550, 8
    %v1553 = vpop.permute.xlu0 %1552
    %v1555 = vsel %vm912, %v1549, %v1553
    %v1556 = vpack.c.bf16 %v1555, %v1555
    %v1557 = vld [vmem:[%s2 + $0x138] sm:$0xf]
    %v1558 = vld [vmem:[%s2 + $0x13c] sm:$0xf]
    %v1559 = vld [vmem:[%s2 + $0x140] sm:$0xf]
    %v1560 = vld [vmem:[%s2 + $0x144] sm:$0xf]
    %v1561 = vld [vmem:[#allocation2 + $0xd8] sm:$0x1]
    %v1562 = vlaneseq
    %v1563 = vshrl.u32 %v1562, 7
    %v1564 = vsub.s32 0, %v1563
    %v1565 = vrot.slane %v1561, %v1564
    %v1570 = vunpack.c.l.b16 %v1557
    %v1571 = vunpack.c.l.b16 %v1558
    %v1572 = vunpack.c.l.b16 %v1559
    %v1573 = vunpack.c.l.b16 %v1560
    %v1574 = vpack.c.b16 %v1571, %v1570
    %v1575 = vpack.c.b16 %v1573, %v1572
    %v1579 = vsel %vm60, %v1556, 0
    %1581 = vmatprep.subr.bf16.mxu0 0
    %1582 = vmatpush1.bf16.msra.mxu0 %v1574
    %1583 = vmatprep.subr.bf16.mxu0 0
    %1584 = vmatpush1.bf16.msra.mxu0 %v1575
    %1585 = vmatprep.subr.bf16.mxu0 0
    %1586 = vmatpush1.bf16.msra.mxu0 0
    %1587 = vmatprep.subr.bf16.mxu0 0
    %1588 = vmatpush1.bf16.msra.mxu0 0
    %1589 = vmatprep.subr.bf16.mxu0 0
    %1590 = vmatpush1.bf16.msra.mxu0 0
    %1591 = vmatprep.subr.bf16.mxu0 0
    %1592 = vmatpush1.bf16.msra.mxu0 0
    %1593 = vmatprep.subr.bf16.mxu0 0
    %1594 = vmatpush1.bf16.msra.mxu0 0
    %1595 = vmatprep.subr.bf16.mxu0 0
    %1596 = vmatpush1.bf16.msra.mxu0 0
    %1597 = vmatprep.subr.bf16.mxu0 0
    %1598 = vmatpush1.bf16.msra.mxu0 0
    %1599 = vmatprep.subr.bf16.mxu0 0
    %1600 = vmatpush1.bf16.msra.mxu0 0
    %1601 = vmatprep.subr.bf16.mxu0 0
    %1602 = vmatpush1.bf16.msra.mxu0 0
    %1603 = vmatprep.subr.bf16.mxu0 0
    %1604 = vmatpush1.bf16.msra.mxu0 0
    %1605 = vmatprep.subr.bf16.mxu0 0
    %1606 = vmatpush1.bf16.msra.mxu0 0
    %1607 = vmatprep.subr.bf16.mxu0 0
    %1608 = vmatpush1.bf16.msra.mxu0 0
    %1609 = vmatprep.subr.bf16.mxu0 0
    %1610 = vmatpush1.bf16.msra.mxu0 0
    %1611 = vmatprep.subr.bf16.mxu0 0
    %1612 = vmatpush1.bf16.msra.mxu0 0
    %1613 = vmatprep.mubr.bf16.mxu0 0
    %1614 = vmatmul.mubr.bf16.gmra.mrb[0].mxu0 %v1579
    %v1615 = vpop.f32.mrb[0].mxu0
    %v1616 = vadd.f32 %v1565, %v1615
    %v1617 = vpop.f32.mrb[0].mxu0
    %v1618 = vpop.f32.mrb[0].mxu0
    %v1619 = vpop.f32.mrb[0].mxu0
    %1620 = vdwg.mxu0
    %v1621 = vmax.f32 %v1616, 0.0
    %v1622 = vld [vmem:[%s2 + $0x148] sm:$0xf]
    %v1623 = vld [vmem:[%s2 + $0x14c] sm:$0xf]
    %v1624 = vld [vmem:[%s2 + $0x150] sm:$0xf]
    %v1625 = vld [vmem:[%s2 + $0x154] sm:$0xf]
    %v1626 = vld [vmem:[#allocation2 + $0xe0] sm:$0x1]
    %v1627 = vpack.c.bf16 %v1621, %v1621
    %v1628 = vlaneseq
    %v1629 = vshrl.u32 %v1628, 7
    %v1630 = vsub.s32 0, %v1629
    %v1631 = vrot.slane %v1626, %v1630
    %v1636 = vunpack.c.l.b16 %v1622
    %v1637 = vunpack.c.l.b16 %v1623
    %v1638 = vunpack.c.l.b16 %v1624
    %v1639 = vunpack.c.l.b16 %v1625
    %v1640 = vpack.c.b16 %v1637, %v1636
    %v1641 = vpack.c.b16 %v1639, %v1638
    %v1645 = vsel %vm60, %v1627, 0
    %1647 = vmatprep.subr.bf16.mxu0 0
    %1648 = vmatpush1.bf16.msra.mxu0 %v1640
    %1649 = vmatprep.subr.bf16.mxu0 0
    %1650 = vmatpush1.bf16.msra.mxu0 %v1641
    %1651 = vmatprep.subr.bf16.mxu0 0
    %1652 = vmatpush1.bf16.msra.mxu0 0
    %1653 = vmatprep.subr.bf16.mxu0 0
    %1654 = vmatpush1.bf16.msra.mxu0 0
    %1655 = vmatprep.subr.bf16.mxu0 0
    %1656 = vmatpush1.bf16.msra.mxu0 0
    %1657 = vmatprep.subr.bf16.mxu0 0
    %1658 = vmatpush1.bf16.msra.mxu0 0
    %1659 = vmatprep.subr.bf16.mxu0 0
    %1660 = vmatpush1.bf16.msra.mxu0 0
    %1661 = vmatprep.subr.bf16.mxu0 0
    %1662 = vmatpush1.bf16.msra.mxu0 0
    %1663 = vmatprep.subr.bf16.mxu0 0
    %1664 = vmatpush1.bf16.msra.mxu0 0
    %1665 = vmatprep.subr.bf16.mxu0 0
    %1666 = vmatpush1.bf16.msra.mxu0 0
    %1667 = vmatprep.subr.bf16.mxu0 0
    %1668 = vmatpush1.bf16.msra.mxu0 0
    %1669 = vmatprep.subr.bf16.mxu0 0
    %1670 = vmatpush1.bf16.msra.mxu0 0
    %1671 = vmatprep.subr.bf16.mxu0 0
    %1672 = vmatpush1.bf16.msra.mxu0 0
    %1673 = vmatprep.subr.bf16.mxu0 0
    %1674 = vmatpush1.bf16.msra.mxu0 0
    %1675 = vmatprep.subr.bf16.mxu0 0
    %1676 = vmatpush1.bf16.msra.mxu0 0
    %1677 = vmatprep.subr.bf16.mxu0 0
    %1678 = vmatpush1.bf16.msra.mxu0 0
    %1679 = vmatprep.mubr.bf16.mxu0 0
    %1680 = vmatmul.mubr.bf16.gmra.mrb[0].mxu0 %v1645
    %v1681 = vpop.f32.mrb[0].mxu0
    %v1682 = vadd.f32 %v1631, %v1681
    %v1683 = vpop.f32.mrb[0].mxu0
    %v1684 = vpop.f32.mrb[0].mxu0
    %v1685 = vpop.f32.mrb[0].mxu0
    %1686 = vdwg.mxu0
    %v1687 = vmax.f32 %v1682, 0.0
    %v1688 = vld [vmem:[%s2 + $0x158] sm:$0xf]
    %v1689 = vld [vmem:[%s2 + $0x15c] sm:$0xf]
    %v1690 = vld [vmem:[%s2 + $0x160] sm:$0xf]
    %v1691 = vld [vmem:[%s2 + $0x164] sm:$0xf]
    %v1692 = vld [vmem:[#allocation2 + $0xe8] sm:$0x1]
    %v1693 = vpack.c.bf16 %v1687, %v1687
    %v1694 = vlaneseq
    %v1695 = vshrl.u32 %v1694, 7
    %v1696 = vsub.s32 0, %v1695
    %v1697 = vrot.slane %v1692, %v1696
    %v1702 = vunpack.c.l.b16 %v1688
    %v1703 = vunpack.c.l.b16 %v1689
    %v1704 = vunpack.c.l.b16 %v1690
    %v1705 = vunpack.c.l.b16 %v1691
    %v1706 = vpack.c.b16 %v1703, %v1702
    %v1707 = vpack.c.b16 %v1705, %v1704
    %v1711 = vsel %vm60, %v1693, 0
    %1713 = vmatprep.subr.bf16.mxu0 0
    %1714 = vmatpush1.bf16.msra.mxu0 %v1706
    %1715 = vmatprep.subr.bf16.mxu0 0
    %1716 = vmatpush1.bf16.msra.mxu0 %v1707
    %1717 = vmatprep.subr.bf16.mxu0 0
    %1718 = vmatpush1.bf16.msra.mxu0 0
    %1719 = vmatprep.subr.bf16.mxu0 0
    %1720 = vmatpush1.bf16.msra.mxu0 0
    %1721 = vmatprep.subr.bf16.mxu0 0
    %1722 = vmatpush1.bf16.msra.mxu0 0
    %1723 = vmatprep.subr.bf16.mxu0 0
    %1724 = vmatpush1.bf16.msra.mxu0 0
    %1725 = vmatprep.subr.bf16.mxu0 0
    %1726 = vmatpush1.bf16.msra.mxu0 0
    %1727 = vmatprep.subr.bf16.mxu0 0
    %1728 = vmatpush1.bf16.msra.mxu0 0
    %1729 = vmatprep.subr.bf16.mxu0 0
    %1730 = vmatpush1.bf16.msra.mxu0 0
    %1731 = vmatprep.subr.bf16.mxu0 0
    %1732 = vmatpush1.bf16.msra.mxu0 0
    %1733 = vmatprep.subr.bf16.mxu0 0
    %1734 = vmatpush1.bf16.msra.mxu0 0
    %1735 = vmatprep.subr.bf16.mxu0 0
    %1736 = vmatpush1.bf16.msra.mxu0 0
    %1737 = vmatprep.subr.bf16.mxu0 0
    %1738 = vmatpush1.bf16.msra.mxu0 0
    %1739 = vmatprep.subr.bf16.mxu0 0
    %1740 = vmatpush1.bf16.msra.mxu0 0
    %1741 = vmatprep.subr.bf16.mxu0 0
    %1742 = vmatpush1.bf16.msra.mxu0 0
    %1743 = vmatprep.subr.bf16.mxu0 0
    %1744 = vmatpush1.bf16.msra.mxu0 0
    %1745 = vmatprep.mubr.bf16.mxu0 0
    %1746 = vmatmul.mubr.bf16.gmra.mrb[0].mxu0 %v1711
    %v1747 = vpop.f32.mrb[0].mxu0
    %v1748 = vadd.f32 %v1697, %v1747
    %v1749 = vpop.f32.mrb[0].mxu0
    %v1750 = vpop.f32.mrb[0].mxu0
    %v1751 = vpop.f32.mrb[0].mxu0
    %1752 = vdwg.mxu0
    %v1753 = vmax.f32 %v1748, 0.0
    %v1754 = vld [vmem:[%s2 + $0x168] sm:$0xf]
    %v1755 = vld [vmem:[%s2 + $0x16c] sm:$0xf]
    %v1756 = vld [vmem:[%s2 + $0x170] sm:$0xf]
    %v1757 = vld [vmem:[%s2 + $0x174] sm:$0xf]
    %v1758 = vld [vmem:[#allocation2 + $0xf0] sm:$0x1]
    %v1759 = vpack.c.bf16 %v1753, %v1753
    %v1760 = vlaneseq
    %v1761 = vshrl.u32 %v1760, 7
    %v1762 = vsub.s32 0, %v1761
    %v1763 = vrot.slane %v1758, %v1762
    %v1768 = vunpack.c.l.b16 %v1754
    %v1769 = vunpack.c.l.b16 %v1755
    %v1770 = vunpack.c.l.b16 %v1756
    %v1771 = vunpack.c.l.b16 %v1757
    %v1772 = vpack.c.b16 %v1769, %v1768
    %v1773 = vpack.c.b16 %v1771, %v1770
    %v1777 = vsel %vm60, %v1759, 0
    %1779 = vmatprep.subr.bf16.mxu0 0
    %1780 = vmatpush1.bf16.msra.mxu0 %v1772
    %1781 = vmatprep.subr.bf16.mxu0 0
    %1782 = vmatpush1.bf16.msra.mxu0 %v1773
    %1783 = vmatprep.subr.bf16.mxu0 0
    %1784 = vmatpush1.bf16.msra.mxu0 0
    %1785 = vmatprep.subr.bf16.mxu0 0
    %1786 = vmatpush1.bf16.msra.mxu0 0
    %1787 = vmatprep.subr.bf16.mxu0 0
    %1788 = vmatpush1.bf16.msra.mxu0 0
    %1789 = vmatprep.subr.bf16.mxu0 0
    %1790 = vmatpush1.bf16.msra.mxu0 0
    %1791 = vmatprep.subr.bf16.mxu0 0
    %1792 = vmatpush1.bf16.msra.mxu0 0
    %1793 = vmatprep.subr.bf16.mxu0 0
    %1794 = vmatpush1.bf16.msra.mxu0 0
    %1795 = vmatprep.subr.bf16.mxu0 0
    %1796 = vmatpush1.bf16.msra.mxu0 0
    %1797 = vmatprep.subr.bf16.mxu0 0
    %1798 = vmatpush1.bf16.msra.mxu0 0
    %1799 = vmatprep.subr.bf16.mxu0 0
    %1800 = vmatpush1.bf16.msra.mxu0 0
    %1801 = vmatprep.subr.bf16.mxu0 0
    %1802 = vmatpush1.bf16.msra.mxu0 0
    %1803 = vmatprep.subr.bf16.mxu0 0
    %1804 = vmatpush1.bf16.msra.mxu0 0
    %1805 = vmatprep.subr.bf16.mxu0 0
    %1806 = vmatpush1.bf16.msra.mxu0 0
    %1807 = vmatprep.subr.bf16.mxu0 0
    %1808 = vmatpush1.bf16.msra.mxu0 0
    %1809 = vmatprep.subr.bf16.mxu0 0
    %1810 = vmatpush1.bf16.msra.mxu0 0
    %1811 = vmatprep.mubr.bf16.mxu0 0
    %1812 = vmatmul.mubr.bf16.gmra.mrb[0].mxu0 %v1777
    %v1813 = vpop.f32.mrb[0].mxu0
    %v1814 = vadd.f32 %v1763, %v1813
    %v1815 = vpop.f32.mrb[0].mxu0
    %v1816 = vpop.f32.mrb[0].mxu0
    %v1817 = vpop.f32.mrb[0].mxu0
    %1818 = vdwg.mxu0
    %v1819 = vmax.f32 %v1814, 0.0
    %v1820 = vld [vmem:[%s2 + $0x178] sm:$0xf]
    %v1821 = vld [vmem:[%s2 + $0x17c] sm:$0xf]
    %v1822 = vld [vmem:[%s2 + $0x180] sm:$0xf]
    %v1823 = vld [vmem:[%s2 + $0x184] sm:$0xf]
    %v1824 = vld [vmem:[#allocation2 + $0xf8] sm:$0x1]
    %v1825 = vpack.c.bf16 %v1819, %v1819
    %v1826 = vlaneseq
    %v1827 = vshrl.u32 %v1826, 7
    %v1828 = vsub.s32 0, %v1827
    %v1829 = vrot.slane %v1824, %v1828
    %v1834 = vunpack.c.l.b16 %v1820
    %v1835 = vunpack.c.l.b16 %v1821
    %v1836 = vunpack.c.l.b16 %v1822
    %v1837 = vunpack.c.l.b16 %v1823
    %v1838 = vpack.c.b16 %v1835, %v1834
    %v1839 = vpack.c.b16 %v1837, %v1836
    %v1843 = vsel %vm60, %v1825, 0
    %1845 = vmatprep.subr.bf16.mxu0 0
    %1846 = vmatpush1.bf16.msra.mxu0 %v1838
    %1847 = vmatprep.subr.bf16.mxu0 0
    %1848 = vmatpush1.bf16.msra.mxu0 %v1839
    %1849 = vmatprep.subr.bf16.mxu0 0
    %1850 = vmatpush1.bf16.msra.mxu0 0
    %1851 = vmatprep.subr.bf16.mxu0 0
    %1852 = vmatpush1.bf16.msra.mxu0 0
    %1853 = vmatprep.subr.bf16.mxu0 0
    %1854 = vmatpush1.bf16.msra.mxu0 0
    %1855 = vmatprep.subr.bf16.mxu0 0
    %1856 = vmatpush1.bf16.msra.mxu0 0
    %1857 = vmatprep.subr.bf16.mxu0 0
    %1858 = vmatpush1.bf16.msra.mxu0 0
    %1859 = vmatprep.subr.bf16.mxu0 0
    %1860 = vmatpush1.bf16.msra.mxu0 0
    %1861 = vmatprep.subr.bf16.mxu0 0
    %1862 = vmatpush1.bf16.msra.mxu0 0
    %1863 = vmatprep.subr.bf16.mxu0 0
    %1864 = vmatpush1.bf16.msra.mxu0 0
    %1865 = vmatprep.subr.bf16.mxu0 0
    %1866 = vmatpush1.bf16.msra.mxu0 0
    %1867 = vmatprep.subr.bf16.mxu0 0
    %1868 = vmatpush1.bf16.msra.mxu0 0
    %1869 = vmatprep.subr.bf16.mxu0 0
    %1870 = vmatpush1.bf16.msra.mxu0 0
    %1871 = vmatprep.subr.bf16.mxu0 0
    %1872 = vmatpush1.bf16.msra.mxu0 0
    %1873 = vmatprep.subr.bf16.mxu0 0
    %1874 = vmatpush1.bf16.msra.mxu0 0
    %1875 = vmatprep.subr.bf16.mxu0 0
    %1876 = vmatpush1.bf16.msra.mxu0 0
    %1877 = vmatprep.mubr.bf16.mxu0 0
    %1878 = vmatmul.mubr.bf16.gmra.mrb[0].mxu0 %v1843
    %v1879 = vpop.f32.mrb[0].mxu0
    %v1880 = vadd.f32 %v1829, %v1879
    %v1881 = vpop.f32.mrb[0].mxu0
    %v1882 = vpop.f32.mrb[0].mxu0
    %v1883 = vpop.f32.mrb[0].mxu0
    %1884 = vdwg.mxu0
    %v1885 = vmax.f32 %v1880, 0.0
    %v1886 = vld [vmem:[%s2 + $0x188] sm:$0xf]
    %v1887 = vld [vmem:[%s2 + $0x18c] sm:$0xf]
    %v1888 = vld [vmem:[%s2 + $0x190] sm:$0xf]
    %v1889 = vld [vmem:[%s2 + $0x194] sm:$0xf]
    %v1890 = vld [vmem:[#allocation2 + $0x100] sm:$0x1]
    %v1891 = vpack.c.bf16 %v1885, %v1885
    %v1892 = vlaneseq
    %v1893 = vshrl.u32 %v1892, 7
    %v1894 = vsub.s32 0, %v1893
    %v1895 = vrot.slane %v1890, %v1894
    %v1900 = vunpack.c.l.b16 %v1886
    %v1901 = vunpack.c.l.b16 %v1887
    %v1902 = vunpack.c.l.b16 %v1888
    %v1903 = vunpack.c.l.b16 %v1889
    %v1904 = vpack.c.b16 %v1901, %v1900
    %v1905 = vpack.c.b16 %v1903, %v1902
    %v1909 = vsel %vm60, %v1891, 0
    %1911 = vmatprep.subr.bf16.mxu0 0
    %1912 = vmatpush1.bf16.msra.mxu0 %v1904
    %1913 = vmatprep.subr.bf16.mxu0 0
    %1914 = vmatpush1.bf16.msra.mxu0 %v1905
    %1915 = vmatprep.subr.bf16.mxu0 0
    %1916 = vmatpush1.bf16.msra.mxu0 0
    %1917 = vmatprep.subr.bf16.mxu0 0
    %1918 = vmatpush1.bf16.msra.mxu0 0
    %1919 = vmatprep.subr.bf16.mxu0 0
    %1920 = vmatpush1.bf16.msra.mxu0 0
    %1921 = vmatprep.subr.bf16.mxu0 0
    %1922 = vmatpush1.bf16.msra.mxu0 0
    %1923 = vmatprep.subr.bf16.mxu0 0
    %1924 = vmatpush1.bf16.msra.mxu0 0
    %1925 = vmatprep.subr.bf16.mxu0 0
    %1926 = vmatpush1.bf16.msra.mxu0 0
    %1927 = vmatprep.subr.bf16.mxu0 0
    %1928 = vmatpush1.bf16.msra.mxu0 0
    %1929 = vmatprep.subr.bf16.mxu0 0
    %1930 = vmatpush1.bf16.msra.mxu0 0
    %1931 = vmatprep.subr.bf16.mxu0 0
    %1932 = vmatpush1.bf16.msra.mxu0 0
    %1933 = vmatprep.subr.bf16.mxu0 0
    %1934 = vmatpush1.bf16.msra.mxu0 0
    %1935 = vmatprep.subr.bf16.mxu0 0
    %1936 = vmatpush1.bf16.msra.mxu0 0
    %1937 = vmatprep.subr.bf16.mxu0 0
    %1938 = vmatpush1.bf16.msra.mxu0 0
    %1939 = vmatprep.subr.bf16.mxu0 0
    %1940 = vmatpush1.bf16.msra.mxu0 0
    %1941 = vmatprep.subr.bf16.mxu0 0
    %1942 = vmatpush1.bf16.msra.mxu0 0
    %1943 = vmatprep.mubr.bf16.mxu0 0
    %1944 = vmatmul.mubr.bf16.gmra.mrb[0].mxu0 %v1909
    %v1945 = vpop.f32.mrb[0].mxu0
    %v1946 = vadd.f32 %v1895, %v1945
    %v1947 = vpop.f32.mrb[0].mxu0
    %v1948 = vpop.f32.mrb[0].mxu0
    %v1949 = vpop.f32.mrb[0].mxu0
    %1950 = vdwg.mxu0
    %v1951 = vmax.f32 %v1946, 0.0
    %v1952 = vld [vmem:[%s2 + $0x198] sm:$0xf]
    %v1953 = vld [vmem:[%s2 + $0x19c] sm:$0xf]
    %v1954 = vld [vmem:[%s2 + $0x1a0] sm:$0xf]
    %v1955 = vld [vmem:[%s2 + $0x1a4] sm:$0xf]
    %v1956 = vld [vmem:[#allocation2 + $0x108] sm:$0x1]
    %v1957 = vpack.c.bf16 %v1951, %v1951
    %v1958 = vlaneseq
    %v1959 = vshrl.u32 %v1958, 7
    %v1960 = vsub.s32 0, %v1959
    %v1961 = vrot.slane %v1956, %v1960
    %v1966 = vunpack.c.l.b16 %v1952
    %v1967 = vunpack.c.l.b16 %v1953
    %v1968 = vunpack.c.l.b16 %v1954
    %v1969 = vunpack.c.l.b16 %v1955
    %v1970 = vpack.c.b16 %v1967, %v1966
    %v1971 = vpack.c.b16 %v1969, %v1968
    %v1975 = vsel %vm60, %v1957, 0
    %1977 = vmatprep.subr.bf16.mxu0 0
    %1978 = vmatpush1.bf16.msra.mxu0 %v1970
    %1979 = vmatprep.subr.bf16.mxu0 0
    %1980 = vmatpush1.bf16.msra.mxu0 %v1971
    %1981 = vmatprep.subr.bf16.mxu0 0
    %1982 = vmatpush1.bf16.msra.mxu0 0
    %1983 = vmatprep.subr.bf16.mxu0 0
    %1984 = vmatpush1.bf16.msra.mxu0 0
    %1985 = vmatprep.subr.bf16.mxu0 0
    %1986 = vmatpush1.bf16.msra.mxu0 0
    %1987 = vmatprep.subr.bf16.mxu0 0
    %1988 = vmatpush1.bf16.msra.mxu0 0
    %1989 = vmatprep.subr.bf16.mxu0 0
    %1990 = vmatpush1.bf16.msra.mxu0 0
    %1991 = vmatprep.subr.bf16.mxu0 0
    %1992 = vmatpush1.bf16.msra.mxu0 0
    %1993 = vmatprep.subr.bf16.mxu0 0
    %1994 = vmatpush1.bf16.msra.mxu0 0
    %1995 = vmatprep.subr.bf16.mxu0 0
    %1996 = vmatpush1.bf16.msra.mxu0 0
    %1997 = vmatprep.subr.bf16.mxu0 0
    %1998 = vmatpush1.bf16.msra.mxu0 0
    %1999 = vmatprep.subr.bf16.mxu0 0
    %2000 = vmatpush1.bf16.msra.mxu0 0
    %2001 = vmatprep.subr.bf16.mxu0 0
    %2002 = vmatpush1.bf16.msra.mxu0 0
    %2003 = vmatprep.subr.bf16.mxu0 0
    %2004 = vmatpush1.bf16.msra.mxu0 0
    %2005 = vmatprep.subr.bf16.mxu0 0
    %2006 = vmatpush1.bf16.msra.mxu0 0
    %2007 = vmatprep.subr.bf16.mxu0 0
    %2008 = vmatpush1.bf16.msra.mxu0 0
    %2009 = vmatprep.mubr.bf16.mxu0 0
    %2010 = vmatmul.mubr.bf16.gmra.mrb[0].mxu0 %v1975
    %v2011 = vpop.f32.mrb[0].mxu0
    %v2012 = vadd.f32 %v1961, %v2011
    %v2013 = vpop.f32.mrb[0].mxu0
    %v2014 = vpop.f32.mrb[0].mxu0
    %v2015 = vpop.f32.mrb[0].mxu0
    %2016 = vdwg.mxu0
    %vm2017 = vcmask 74752
    %2018 = vst.msk [vmem:[#allocation5] sm:$0x3] %vm2017, %v2012
    // Predicated region
    $region22: #{_forward.1} parent=1 // pred_check
      _
    $region23: #{_forward.1} parent=1 // pred_check_branch
      %2020 = sbr.rel (0) target = $region25
    $region24: #{_forward.1} parent=1 // pred_region
      %s2022 = ssub.s32 32, 32
      %2023 = vsyncadd [#allocation4], %s2022
      %s2025 = sshll.u32 [#allocation5], 4
      %s2026 = int_to_ptr.vmem [resolvable:$true] %s2025
      %2028 = dma.vmem_to_hbm [thread:$0]  %s2026, 32, %s4, [#allocation4]
    $region25: #{_forward.1} parent=1 // pred_fallthru
      _
    // Predicated region
    $region26: #{_forward.1} parent=1 // pred_check
      _
    $region27: #{_forward.1} parent=1 // pred_check_branch
      %2030 = sbr.rel (0) target = $region29
    $region28: #{_forward.1} parent=1 // pred_region
      %2031 = dma.done [#allocation4], 32
    $region29: #{_forward.1} parent=1 // pred_fallthru
      _
    %2032 = vsyncpa [#allocation3], 1
    %2033 = vsyncpa [#allocation4], 1

</llo_original>
